<compile_context>
chip_gen: v7x
topology: tpu7x:2x2x1
jax: 0.10.0
libtpu: 0.0.40
codegen_flags: <defaults>
</compile_context>

<pallas_src>
import math
import functools

import jax
import jax.numpy as jnp
import numpy as np
from jax import lax
from jax.experimental import pallas as pl
from jax.experimental.pallas import tpu as pltpu


_MASK_VALUE = -1e30  # large finite negative (safer than -inf for masked rows)


# ---------------------------------------------------------------------------
# In-kernel helpers (traced, pure jnp/lax, f32)
# ---------------------------------------------------------------------------
def _layernorm(h, w, b, eps=1e-5):
    mu = jnp.mean(h, axis=-1, keepdims=True)
    var = jnp.mean((h - mu) ** 2, axis=-1, keepdims=True)
    return (h - mu) * lax.rsqrt(var + eps) * w + b


def _new_gelu(x):
    c = math.sqrt(2.0 / math.pi)
    return 0.5 * x * (1.0 + jnp.tanh(c * (x + 0.044715 * x * x * x)))


# ---------------------------------------------------------------------------
# Pallas kernel: full transformer block for one block of batch elements
# ---------------------------------------------------------------------------
def block_kernel(x_ref,
                 ln1w_ref, ln1b_ref,
                 wqkv_ref, bqkv_ref,      # (n_head, C, 3*hd) cdt, (n_head, 1, 3*hd) f32
                 wproj_ref, bproj_ref,    # (n_head, hd, C) cdt,   (1, C) f32
                 ln2w_ref, ln2b_ref,
                 wfc_ref, bfc_ref,        # (n_chunks, C, chunk) cdt, (n_chunks, 1, chunk) f32
                 wfc2_ref, bfc2_ref,      # (n_chunks, chunk, C) cdt, (1, C) f32
                 o_ref,
                 *, compute_dtype):
    Bb, T, C = x_ref.shape
    R = Bb * T
    n_head = wqkv_ref.shape[0]
    hd = C // n_head
    cdt = compute_dtype

    # Flatten the batch block into rows: all row-wise ops run on one (R, C) slab.
    x = x_ref[...].astype(jnp.float32).reshape(R, C)

    # ---- LN1 (f32) on the whole slab; cast once for the MXU ----
    h = _layernorm(x, ln1w_ref[...], ln1b_ref[...])
    h_c = h.astype(cdt)

    # ---- Causal mask bias, hoisted (built exactly once per grid step) ----
    row = lax.broadcasted_iota(jnp.int32, (T, T), 0)
    col = lax.broadcasted_iota(jnp.int32, (T, T), 1)
    mask_bias = jnp.where(col <= row, 0.0, _MASK_VALUE).astype(jnp.float32)

    # ---- Causal self-attention: fori_loop over heads (bounded live ranges) ----
    def head_body(hidx, acc):
        # Fused per-head QKV projection; Q scale already folded into the weights.
        # Dynamic indexing only on the leading dim of the weight refs.
        qkv = jnp.dot(h_c, wqkv_ref[hidx],
                      preferred_element_type=jnp.float32) + bqkv_ref[hidx]   # (R, 3hd) f32
        q = qkv[:, 0 * hd:1 * hd].astype(cdt).reshape(Bb, T, hd)
        k = qkv[:, 1 * hd:2 * hd].astype(cdt).reshape(Bb, T, hd)
        v = qkv[:, 2 * hd:3 * hd].astype(cdt).reshape(Bb, T, hd)
        # Scores / PV batched over the batch block; head dim contracted directly
        # (no k.T materialization).
        s = jnp.einsum("bqd,bkd->bqk", q, k,
                       preferred_element_type=jnp.float32) + mask_bias        # (Bb, T, T)
        s = s - jnp.max(s, axis=-1, keepdims=True)
        p = jnp.exp(s)
        p = p * pl.reciprocal(jnp.sum(p, axis=-1, keepdims=True), approx=True)
        o = jnp.einsum("bqk,bkd->bqd", p.astype(cdt), v,
                       preferred_element_type=jnp.float32)                    # (Bb, T, hd)
        # Fold this head straight into the output projection: no (R, C) head-assembly
        # scratch and no lane-narrow masked stores.
        return acc + jnp.dot(o.reshape(R, hd).astype(cdt), wproj_ref[hidx],
                             preferred_element_type=jnp.float32)

    y = lax.fori_loop(0, n_head, head_body, jnp.zeros((R, C), jnp.float32))
    x1 = x + y + bproj_ref[...]

    # ---- LN2 + MLP (GELU) + residual; hidden (4C) dim chunked by fori_loop ----
    h2_c = _layernorm(x1, ln2w_ref[...], ln2b_ref[...]).astype(cdt)
    n_chunks = wfc_ref.shape[0]

    def mlp_body(j, acc):
        m = jnp.dot(h2_c, wfc_ref[j],
                    preferred_element_type=jnp.float32) + bfc_ref[j]          # (R, chunk)
        m = _new_gelu(m)                                                      # f32 epilogue
        return acc + jnp.dot(m.astype(cdt), wfc2_ref[j],
                             preferred_element_type=jnp.float32)

    mo = lax.fori_loop(0, n_chunks, mlp_body, jnp.zeros((R, C), jnp.float32))
    x2 = x1 + mo + bfc2_ref[...]

    o_ref[...] = x2.reshape(Bb, T, C).astype(o_ref.dtype)


# ---------------------------------------------------------------------------
# Wrapper
# ---------------------------------------------------------------------------
def _prep_weights(params, n_head, compute_dtype, mlp_chunk):
    """One-time weight relayout: per-head / per-chunk, leading-dim indexed in-kernel."""
    C = params["w_qkv"].shape[0]
    H = params["w_fc"].shape[1]
    hd = C // n_head
    scale = 1.0 / math.sqrt(hd)
    f32 = lambda a: jnp.asarray(a, jnp.float32)

    wq, wk, wv = jnp.split(f32(params["w_qkv"]), 3, axis=1)          # (C, C) each
    bq, bk, bv = jnp.split(f32(params["b_qkv"]).reshape(3 * C), 3)   # (C,) each
    wq = wq * scale      # fold 1/sqrt(head_dim) into the Q projection (weight + bias)
    bq = bq * scale

    def per_head_w(w):   # (C, C) -> (n_head, C, hd)
        return w.reshape(C, n_head, hd).transpose(1, 0, 2)

    def per_head_b(b):   # (C,) -> (n_head, 1, hd)
        return b.reshape(n_head, hd)[:, None, :]

    wqkv_h = jnp.concatenate([per_head_w(wq), per_head_w(wk), per_head_w(wv)],
                             axis=2).astype(compute_dtype)            # (n_head, C, 3hd)
    bqkv_h = jnp.concatenate([per_head_b(bq), per_head_b(bk), per_head_b(bv)],
                             axis=2)                                  # (n_head, 1, 3hd) f32
    wproj_h = f32(params["w_proj"]).reshape(n_head, hd, C).astype(compute_dtype)

    n_chunks = H // mlp_chunk
    wfc_c = (f32(params["w_fc"]).reshape(C, n_chunks, mlp_chunk)
             .transpose(1, 0, 2).astype(compute_dtype))               # (n_chunks, C, chunk)
    bfc_c = f32(params["b_fc"]).reshape(n_chunks, 1, mlp_chunk)       # (n_chunks, 1, chunk)
    wfc2_c = f32(params["w_fc2"]).reshape(n_chunks, mlp_chunk, C).astype(compute_dtype)

    return dict(ln1w=f32(params["ln1_w"]), ln1b=f32(params["ln1_b"]),
                wqkv=wqkv_h, bqkv=bqkv_h,
                wproj=wproj_h, bproj=f32(params["b_proj"]),
                ln2w=f32(params["ln2_w"]), ln2b=f32(params["ln2_b"]),
                wfc=wfc_c, bfc=bfc_c, wfc2=wfc2_c, bfc2=f32(params["b_fc2"]))


def transformer_block(x, params, n_head, *, batch_block=None,
                      compute_dtype=jnp.bfloat16, mlp_chunk=512,
                      vmem_limit_mb=48):
    """Fused transformer block forward.

    VMEM sizing (re-derive per generation):
      * v7x (64 MiB):  keep vmem_limit_mb <= ~56 and choose batch_block so the f32
        activation slabs (~6 copies of (batch_block*T, C)) + single-buffered weights +
        double-buffered x/out blocks stay under ~48 MiB.
      * v6e / v5e (128 MiB): raise vmem_limit_mb to ~96-100 and grow batch_block so
        R = batch_block*T is a large multiple of 256 (v6e) / 128 (v5e) for MXU fill and
        per-grid-step overhead amortization.
    """
    B, T, C = x.shape
    assert C % n_head == 0
    H = params["w_fc"].shape[1]
    mlp_chunk = min(mlp_chunk, H)
    assert H % mlp_chunk == 0, "mlp_chunk must divide the MLP hidden dim"

    if batch_block is None:
        # >= 2 grid steps by default: lets dimension_semantics=("parallel",) shard the
        # grid across v7x's two TensorCores and pipelines the x/out DMAs on all chips.
        batch_block = max(1, B // 2)
    while B % batch_block:
        batch_block -= 1

    w = _prep_weights(params, n_head, compute_dtype, mlp_chunk)
    operands = (x,
                w["ln1w"], w["ln1b"],
                w["wqkv"], w["bqkv"],
                w["wproj"], w["bproj"],
                w["ln2w"], w["ln2b"],
                w["wfc"], w["bfc"],
                w["wfc2"], w["bfc2"])

    def weight_spec(arr):
        # Constant across the grid -> single-buffer (the default double-buffering would
        # waste VMEM better spent on a larger batch_block, esp. on v7x's 64 MiB).
        return pl.BlockSpec(arr.shape, lambda b: (0,) * arr.ndim,
                            pipeline_mode=pl.Buffered(1))

    in_specs = ([pl.BlockSpec((batch_block, T, C), lambda b: (b, 0, 0))]
                + [weight_spec(a) for a in operands[1:]])

    kernel = functools.partial(block_kernel, compute_dtype=compute_dtype)

    return pl.pallas_call(
        kernel,
        out_shape=jax.ShapeDtypeStruct((B, T, C), x.dtype),
        grid_spec=pltpu.PrefetchScalarGridSpec(
            num_scalar_prefetch=0,
            grid=(B // batch_block,),
            in_specs=in_specs,
            out_specs=pl.BlockSpec((batch_block, T, C), lambda b: (b, 0, 0)),
        ),
        compiler_params=pltpu.CompilerParams(
            dimension_semantics=("parallel",),
            vmem_limit_bytes=vmem_limit_mb * 1024 * 1024,
        ),
    )(*operands)


# ---------------------------------------------------------------------------
# Pure-JAX reference (mirrors the PyTorch forward exactly, f32)
# ---------------------------------------------------------------------------
def reference_block(x, p, n_head):
    B, T, C = x.shape
    hd = C // n_head

    def ln(h, w, b):
        mu = h.mean(-1, keepdims=True)
        var = ((h - mu) ** 2).mean(-1, keepdims=True)
        return (h - mu) / jnp.sqrt(var + 1e-5) * w + b

    h = ln(x, p["ln1_w"][0], p["ln1_b"][0])
    qkv = h @ p["w_qkv"] + p["b_qkv"][0]
    q, k, v = jnp.split(qkv, 3, axis=-1)
    q = q.reshape(B, T, n_head, hd).transpose(0, 2, 1, 3)
    k = k.reshape(B, T, n_head, hd).transpose(0, 2, 1, 3)
    v = v.reshape(B, T, n_head, hd).transpose(0, 2, 1, 3)
    att = jnp.einsum("bhqd,bhkd->bhqk", q, k) / math.sqrt(hd)
    mask = jnp.tril(jnp.ones((T, T), bool))
    att = jnp.where(mask, att, -jnp.inf)
    att = jax.nn.softmax(att, axis=-1)
    y = jnp.einsum("bhqk,bhkd->bhqd", att, v)
    y = y.transpose(0, 2, 1, 3).reshape(B, T, C)
    y = y @ p["w_proj"] + p["b_proj"][0]
    x1 = x + y
    h2 = ln(x1, p["ln2_w"][0], p["ln2_b"][0])
    m = h2 @ p["w_fc"] + p["b_fc"][0]
    c = math.sqrt(2.0 / math.pi)
    m = 0.5 * m * (1.0 + jnp.tanh(c * (m + 0.044715 * m ** 3)))
    m = m @ p["w_fc2"] + p["b_fc2"][0]
    return x1 + m


# ---------------------------------------------------------------------------
# Main
# ---------------------------------------------------------------------------
if __name__ == "__main__":
    # Small config: n_embd=32, n_head=4, block_size(T)=8, batch=2, bias=True, dropout=0.0
    B, T, C, n_head = 2, 8, 32, 4
    key = jax.random.PRNGKey(0)
    keys = jax.random.split(key, 8)

    def init_linear(k, fan_in, fan_out):
        # nn.Linear-style uniform init, stored transposed as (in, out)
        bound = 1.0 / math.sqrt(fan_in)
        kw, kb = jax.random.split(k)
        w = jax.random.uniform(kw, (fan_in, fan_out), jnp.float32, -bound, bound)
        b = jax.random.uniform(kb, (1, fan_out), jnp.float32, -bound, bound)
        return w, b

    w_qkv, b_qkv = init_linear(keys[0], C, 3 * C)
    w_proj, b_proj = init_linear(keys[1], C, C)
    w_fc, b_fc = init_linear(keys[2], C, 4 * C)
    w_fc2, b_fc2 = init_linear(keys[3], 4 * C, C)

    params = dict(
        ln1_w=jnp.ones((1, C), jnp.float32), ln1_b=jnp.zeros((1, C), jnp.float32),
        w_qkv=w_qkv, b_qkv=b_qkv,
        w_proj=w_proj, b_proj=b_proj,
        ln2_w=jnp.ones((1, C), jnp.float32), ln2_b=jnp.zeros((1, C), jnp.float32),
        w_fc=w_fc, b_fc=b_fc,
        w_fc2=w_fc2, b_fc2=b_fc2,
    )

    x = jax.random.normal(keys[4], (B, T, C), jnp.float32)
    ref = jax.block_until_ready(reference_block(x, params, n_head))

    # f32 compute path (only the approx softmax reciprocal differs from the reference).
    out_f32 = jax.block_until_ready(
        transformer_block(x, params, n_head, compute_dtype=jnp.float32))
    np.testing.assert_allclose(np.asarray(out_f32), np.asarray(ref), rtol=2e-2, atol=2e-2)

    # bf16 matmul path (f32 accumulation) — the fast production path.
    out_bf16 = jax.block_until_ready(
        transformer_block(x, params, n_head, compute_dtype=jnp.bfloat16))
    np.testing.assert_allclose(np.asarray(out_bf16), np.asarray(ref), rtol=5e-2, atol=5e-2)

    print("KERNEL_OK")
</pallas_src>

<mosaic_0001>
module attributes {stable_mosaic.version = 11 : i64} {
  func.func @block_kernel(%arg0: i32, %arg1: memref<1x8x32xf32, #tpu.memory_space<vmem>>, %arg2: memref<1x32xf32, #tpu.memory_space<vmem>>, %arg3: memref<1x32xf32, #tpu.memory_space<vmem>>, %arg4: memref<4x32x24xf32, #tpu.memory_space<vmem>>, %arg5: memref<4x1x24xf32, #tpu.memory_space<vmem>>, %arg6: memref<4x8x32xf32, #tpu.memory_space<vmem>>, %arg7: memref<1x32xf32, #tpu.memory_space<vmem>>, %arg8: memref<1x32xf32, #tpu.memory_space<vmem>>, %arg9: memref<1x32xf32, #tpu.memory_space<vmem>>, %arg10: memref<1x32x128xf32, #tpu.memory_space<vmem>>, %arg11: memref<1x1x128xf32, #tpu.memory_space<vmem>>, %arg12: memref<1x128x32xf32, #tpu.memory_space<vmem>>, %arg13: memref<1x32xf32, #tpu.memory_space<vmem>>, %arg14: memref<1x8x32xf32, #tpu.memory_space<vmem>>) attributes {dimension_semantics = [#tpu.dimension_semantics<parallel>], iteration_bounds = array<i64: 2>, scalar_prefetch = 0 : i64, scratch_operands = 0 : i64, tpu.core_type = #tpu.core_type<tc>, window_params = [{transform_indices = @transform_0, window_bounds = array<i64: 1, 8, 32>}, {pipeline_mode = #tpu.pipeline_mode<synchronous>, transform_indices = @transform_1, window_bounds = array<i64: 1, 32>}, {pipeline_mode = #tpu.pipeline_mode<synchronous>, transform_indices = @transform_2, window_bounds = array<i64: 1, 32>}, {pipeline_mode = #tpu.pipeline_mode<synchronous>, transform_indices = @transform_3, window_bounds = array<i64: 4, 32, 24>}, {pipeline_mode = #tpu.pipeline_mode<synchronous>, transform_indices = @transform_4, window_bounds = array<i64: 4, 1, 24>}, {pipeline_mode = #tpu.pipeline_mode<synchronous>, transform_indices = @transform_5, window_bounds = array<i64: 4, 8, 32>}, {pipeline_mode = #tpu.pipeline_mode<synchronous>, transform_indices = @transform_6, window_bounds = array<i64: 1, 32>}, {pipeline_mode = #tpu.pipeline_mode<synchronous>, transform_indices = @transform_7, window_bounds = array<i64: 1, 32>}, {pipeline_mode = #tpu.pipeline_mode<synchronous>, transform_indices = @transform_8, window_bounds = array<i64: 1, 32>}, {pipeline_mode = #tpu.pipeline_mode<synchronous>, transform_indices = @transform_9, window_bounds = array<i64: 1, 32, 128>}, {pipeline_mode = #tpu.pipeline_mode<synchronous>, transform_indices = @transform_10, window_bounds = array<i64: 1, 1, 128>}, {pipeline_mode = #tpu.pipeline_mode<synchronous>, transform_indices = @transform_11, window_bounds = array<i64: 1, 128, 32>}, {pipeline_mode = #tpu.pipeline_mode<synchronous>, transform_indices = @transform_12, window_bounds = array<i64: 1, 32>}, {transform_indices = @transform_13, window_bounds = array<i64: 1, 8, 32>}]} {
    %c0 = arith.constant 0 : index
    %c0_0 = arith.constant 0 : index
    %c0_1 = arith.constant 0 : index
    %0 = vector.load %arg1[%c0, %c0_0, %c0_1] : memref<1x8x32xf32, #tpu.memory_space<vmem>>, vector<1x8x32xf32>
    %1 = vector.shape_cast %0 : vector<1x8x32xf32> to vector<8x32xf32>
    %c0_2 = arith.constant 0 : index
    %c0_3 = arith.constant 0 : index
    %2 = vector.load %arg2[%c0_2, %c0_3] : memref<1x32xf32, #tpu.memory_space<vmem>>, vector<1x32xf32>
    %c0_4 = arith.constant 0 : index
    %c0_5 = arith.constant 0 : index
    %3 = vector.load %arg3[%c0_4, %c0_5] : memref<1x32xf32, #tpu.memory_space<vmem>>, vector<1x32xf32>
    %cst = arith.constant dense<0.000000e+00> : vector<8xf32>
    %4 = vector.multi_reduction <add>, %1, %cst [1] : vector<8x32xf32> to vector<8xf32>
    %5 = vector.shape_cast %4 : vector<8xf32> to vector<8x1xf32>
    %cst_6 = arith.constant 3.200000e+01 : f32
    %6 = vector.broadcast %cst_6 : f32 to vector<8x1xf32>
    %7 = arith.divf %5, %6 : vector<8x1xf32>
    %8 = vector.broadcast %7 : vector<8x1xf32> to vector<8x32xf32>
    %9 = arith.subf %1, %8 : vector<8x32xf32>
    %10 = arith.mulf %9, %9 : vector<8x32xf32>
    %cst_7 = arith.constant dense<0.000000e+00> : vector<8xf32>
    %11 = vector.multi_reduction <add>, %10, %cst_7 [1] : vector<8x32xf32> to vector<8xf32>
    %12 = vector.shape_cast %11 : vector<8xf32> to vector<8x1xf32>
    %cst_8 = arith.constant 3.200000e+01 : f32
    %13 = vector.broadcast %cst_8 : f32 to vector<8x1xf32>
    %14 = arith.divf %12, %13 : vector<8x1xf32>
    %15 = vector.broadcast %7 : vector<8x1xf32> to vector<8x32xf32>
    %16 = arith.subf %1, %15 : vector<8x32xf32>
    %cst_9 = arith.constant 9.99999974E-6 : f32
    %17 = vector.broadcast %cst_9 : f32 to vector<8x1xf32>
    %18 = arith.addf %14, %17 : vector<8x1xf32>
    %19 = math.rsqrt %18 : vector<8x1xf32>
    %20 = vector.broadcast %19 : vector<8x1xf32> to vector<8x32xf32>
    %21 = arith.mulf %16, %20 : vector<8x32xf32>
    %22 = vector.broadcast %2 : vector<1x32xf32> to vector<8x32xf32>
    %23 = arith.mulf %21, %22 : vector<8x32xf32>
    %24 = vector.broadcast %3 : vector<1x32xf32> to vector<8x32xf32>
    %25 = arith.addf %23, %24 : vector<8x32xf32>
    %26 = tpu.iota {dimensions = array<i32: 0>} : vector<8x8xi32>
    %27 = tpu.iota {dimensions = array<i32: 1>} : vector<8x8xi32>
    %28 = arith.cmpi sle, %27, %26 : vector<8x8xi32>
    %cst_10 = arith.constant 0.000000e+00 : f32
    %cst_11 = arith.constant -1.000000e+30 : f32
    %29 = vector.broadcast %cst_10 : f32 to vector<8x8xf32>
    %30 = vector.broadcast %cst_11 : f32 to vector<8x8xf32>
    %31 = arith.select %28, %29, %30 : vector<8x8xi1>, vector<8x8xf32>
    %cst_12 = arith.constant 0.000000e+00 : f32
    %32 = vector.broadcast %cst_12 : f32 to vector<8x32xf32>
    %c0_i32 = arith.constant 0 : i32
    %c4_i32 = arith.constant 4 : i32
    %33 = arith.addi %c0_i32, %c4_i32 : i32
    %c1_i32 = arith.constant 1 : i32
    %34 = scf.for %arg15 = %c0_i32 to %33 step %c1_i32 iter_args(%arg16 = %32) -> (vector<8x32xf32>)  : i32 {
      %97 = arith.index_cast %arg15 : i32 to index
      %c0_45 = arith.constant 0 : index
      %c0_46 = arith.constant 0 : index
      %98 = vector.load %arg4[%97, %c0_45, %c0_46] : memref<4x32x24xf32, #tpu.memory_space<vmem>>, vector<1x32x24xf32>
      %99 = vector.shape_cast %98 : vector<1x32x24xf32> to vector<32x24xf32>
      %cst_47 = arith.constant dense<0.000000e+00> : vector<8x24xf32>
      %100 = tpu.matmul %25, %99, %cst_47 {dimension_numbers = #tpu.dot_dimension_numbers<[1], [0], [0], [1], [0, 0, 1, 1], [], []>} : vector<8x32xf32>, vector<32x24xf32>, vector<8x24xf32> -> vector<8x24xf32>
      %101 = arith.index_cast %arg15 : i32 to index
      %c0_48 = arith.constant 0 : index
      %c0_49 = arith.constant 0 : index
      %102 = vector.load %arg5[%101, %c0_48, %c0_49] : memref<4x1x24xf32, #tpu.memory_space<vmem>>, vector<1x1x24xf32>
      %103 = vector.shape_cast %102 : vector<1x1x24xf32> to vector<1x24xf32>
      %104 = vector.broadcast %103 : vector<1x24xf32> to vector<8x24xf32>
      %105 = arith.addf %100, %104 : vector<8x24xf32>
      %106 = vector.extract_strided_slice %105 {offsets = [0, 0], sizes = [8, 8], strides = [1, 1]} : vector<8x24xf32> to vector<8x8xf32>
      %107 = vector.shape_cast %106 : vector<8x8xf32> to vector<1x8x8xf32>
      %108 = vector.extract_strided_slice %105 {offsets = [0, 8], sizes = [8, 8], strides = [1, 1]} : vector<8x24xf32> to vector<8x8xf32>
      %109 = vector.shape_cast %108 : vector<8x8xf32> to vector<1x8x8xf32>
      %110 = vector.extract_strided_slice %105 {offsets = [0, 16], sizes = [8, 8], strides = [1, 1]} : vector<8x24xf32> to vector<8x8xf32>
      %111 = vector.shape_cast %110 : vector<8x8xf32> to vector<1x8x8xf32>
      "tpu.trace_start"() <{level = 10 : i32, message = "bqd,bkd->bqk"}> : () -> ()
      %cst_50 = arith.constant dense<0.000000e+00> : vector<1x8x8xf32>
      %112 = tpu.matmul %107, %109, %cst_50 {dimension_numbers = #tpu.dot_dimension_numbers<[2], [2], [1], [1], [0, 0, 0, 1, 1, 1], [0], [0]>} : vector<1x8x8xf32>, vector<1x8x8xf32>, vector<1x8x8xf32> -> vector<1x8x8xf32>
      "tpu.trace_stop"() : () -> ()
      %113 = vector.shape_cast %31 : vector<8x8xf32> to vector<1x8x8xf32>
      %114 = arith.addf %112, %113 : vector<1x8x8xf32>
      %cst_51 = arith.constant dense<0xFF800000> : vector<1x8xf32>
      %115 = vector.multi_reduction <maximumf>, %114, %cst_51 [2] : vector<1x8x8xf32> to vector<1x8xf32>
      %116 = vector.shape_cast %115 : vector<1x8xf32> to vector<1x8x1xf32>
      %117 = vector.broadcast %116 : vector<1x8x1xf32> to vector<1x8x8xf32>
      %118 = arith.subf %114, %117 : vector<1x8x8xf32>
      %119 = math.exp %118 : vector<1x8x8xf32>
      %cst_52 = arith.constant dense<0.000000e+00> : vector<1x8xf32>
      %120 = vector.multi_reduction <add>, %119, %cst_52 [2] : vector<1x8x8xf32> to vector<1x8xf32>
      %121 = vector.shape_cast %120 : vector<1x8xf32> to vector<1x8x1xf32>
      %122 = tpu.reciprocal %121 {approx = true} : vector<1x8x1xf32> -> vector<1x8x1xf32>
      %123 = vector.broadcast %122 : vector<1x8x1xf32> to vector<1x8x8xf32>
      %124 = arith.mulf %119, %123 : vector<1x8x8xf32>
      "tpu.trace_start"() <{level = 10 : i32, message = "bqk,bkd->bqd"}> : () -> ()
      %cst_53 = arith.constant dense<0.000000e+00> : vector<1x8x8xf32>
      %125 = tpu.matmul %124, %111, %cst_53 {dimension_numbers = #tpu.dot_dimension_numbers<[2], [1], [1], [2], [0, 0, 0, 1, 1, 2], [0], [0]>} : vector<1x8x8xf32>, vector<1x8x8xf32>, vector<1x8x8xf32> -> vector<1x8x8xf32>
      "tpu.trace_stop"() : () -> ()
      %126 = vector.shape_cast %125 : vector<1x8x8xf32> to vector<8x8xf32>
      %127 = arith.index_cast %arg15 : i32 to index
      %c0_54 = arith.constant 0 : index
      %c0_55 = arith.constant 0 : index
      %128 = vector.load %arg6[%127, %c0_54, %c0_55] : memref<4x8x32xf32, #tpu.memory_space<vmem>>, vector<1x8x32xf32>
      %129 = vector.shape_cast %128 : vector<1x8x32xf32> to vector<8x32xf32>
      %cst_56 = arith.constant dense<0.000000e+00> : vector<8x32xf32>
      %130 = tpu.matmul %126, %129, %cst_56 {dimension_numbers = #tpu.dot_dimension_numbers<[1], [0], [0], [1], [0, 0, 1, 1], [], []>} : vector<8x8xf32>, vector<8x32xf32>, vector<8x32xf32> -> vector<8x32xf32>
      %131 = arith.addf %arg16, %130 : vector<8x32xf32>
      scf.yield %131 : vector<8x32xf32>
    }
    %c4_i32_13 = arith.constant 4 : i32
    %35 = arith.addf %1, %34 : vector<8x32xf32>
    %c0_14 = arith.constant 0 : index
    %c0_15 = arith.constant 0 : index
    %36 = vector.load %arg7[%c0_14, %c0_15] : memref<1x32xf32, #tpu.memory_space<vmem>>, vector<1x32xf32>
    %37 = vector.broadcast %36 : vector<1x32xf32> to vector<8x32xf32>
    %38 = arith.addf %35, %37 : vector<8x32xf32>
    %c0_16 = arith.constant 0 : index
    %c0_17 = arith.constant 0 : index
    %39 = vector.load %arg8[%c0_16, %c0_17] : memref<1x32xf32, #tpu.memory_space<vmem>>, vector<1x32xf32>
    %c0_18 = arith.constant 0 : index
    %c0_19 = arith.constant 0 : index
    %40 = vector.load %arg9[%c0_18, %c0_19] : memref<1x32xf32, #tpu.memory_space<vmem>>, vector<1x32xf32>
    %cst_20 = arith.constant dense<0.000000e+00> : vector<8xf32>
    %41 = vector.multi_reduction <add>, %38, %cst_20 [1] : vector<8x32xf32> to vector<8xf32>
    %42 = vector.shape_cast %41 : vector<8xf32> to vector<8x1xf32>
    %cst_21 = arith.constant 3.200000e+01 : f32
    %43 = vector.broadcast %cst_21 : f32 to vector<8x1xf32>
    %44 = arith.divf %42, %43 : vector<8x1xf32>
    %45 = vector.broadcast %44 : vector<8x1xf32> to vector<8x32xf32>
    %46 = arith.subf %38, %45 : vector<8x32xf32>
    %47 = arith.mulf %46, %46 : vector<8x32xf32>
    %cst_22 = arith.constant dense<0.000000e+00> : vector<8xf32>
    %48 = vector.multi_reduction <add>, %47, %cst_22 [1] : vector<8x32xf32> to vector<8xf32>
    %49 = vector.shape_cast %48 : vector<8xf32> to vector<8x1xf32>
    %cst_23 = arith.constant 3.200000e+01 : f32
    %50 = vector.broadcast %cst_23 : f32 to vector<8x1xf32>
    %51 = arith.divf %49, %50 : vector<8x1xf32>
    %52 = vector.broadcast %44 : vector<8x1xf32> to vector<8x32xf32>
    %53 = arith.subf %38, %52 : vector<8x32xf32>
    %cst_24 = arith.constant 9.99999974E-6 : f32
    %54 = vector.broadcast %cst_24 : f32 to vector<8x1xf32>
    %55 = arith.addf %51, %54 : vector<8x1xf32>
    %56 = math.rsqrt %55 : vector<8x1xf32>
    %57 = vector.broadcast %56 : vector<8x1xf32> to vector<8x32xf32>
    %58 = arith.mulf %53, %57 : vector<8x32xf32>
    %59 = vector.broadcast %39 : vector<1x32xf32> to vector<8x32xf32>
    %60 = arith.mulf %58, %59 : vector<8x32xf32>
    %61 = vector.broadcast %40 : vector<1x32xf32> to vector<8x32xf32>
    %62 = arith.addf %60, %61 : vector<8x32xf32>
    %cst_25 = arith.constant 0.000000e+00 : f32
    %63 = vector.broadcast %cst_25 : f32 to vector<8x32xf32>
    %c0_i32_26 = arith.constant 0 : i32
    %64 = arith.index_cast %c0_i32_26 : i32 to index
    %c0_27 = arith.constant 0 : index
    %c0_28 = arith.constant 0 : index
    %65 = vector.load %arg10[%64, %c0_27, %c0_28] : memref<1x32x128xf32, #tpu.memory_space<vmem>>, vector<1x32x128xf32>
    %66 = vector.shape_cast %65 : vector<1x32x128xf32> to vector<32x128xf32>
    %cst_29 = arith.constant dense<0.000000e+00> : vector<8x128xf32>
    %67 = tpu.matmul %62, %66, %cst_29 {dimension_numbers = #tpu.dot_dimension_numbers<[1], [0], [0], [1], [0, 0, 1, 1], [], []>} : vector<8x32xf32>, vector<32x128xf32>, vector<8x128xf32> -> vector<8x128xf32>
    %68 = arith.index_cast %c0_i32_26 : i32 to index
    %c0_30 = arith.constant 0 : index
    %c0_31 = arith.constant 0 : index
    %69 = vector.load %arg11[%68, %c0_30, %c0_31] : memref<1x1x128xf32, #tpu.memory_space<vmem>>, vector<1x1x128xf32>
    %70 = vector.shape_cast %69 : vector<1x1x128xf32> to vector<1x128xf32>
    %71 = vector.broadcast %70 : vector<1x128xf32> to vector<8x128xf32>
    %72 = arith.addf %67, %71 : vector<8x128xf32>
    %cst_32 = arith.constant 5.000000e-01 : f32
    %73 = vector.broadcast %cst_32 : f32 to vector<8x128xf32>
    %74 = arith.mulf %73, %72 : vector<8x128xf32>
    %cst_33 = arith.constant 4.471500e-02 : f32
    %75 = vector.broadcast %cst_33 : f32 to vector<8x128xf32>
    %76 = arith.mulf %75, %72 : vector<8x128xf32>
    %77 = arith.mulf %76, %72 : vector<8x128xf32>
    %78 = arith.mulf %77, %72 : vector<8x128xf32>
    %79 = arith.addf %72, %78 : vector<8x128xf32>
    %cst_34 = arith.constant 0.797884583 : f32
    %80 = vector.broadcast %cst_34 : f32 to vector<8x128xf32>
    %81 = arith.mulf %80, %79 : vector<8x128xf32>
    %82 = math.tanh %81 : vector<8x128xf32>
    %cst_35 = arith.constant 1.000000e+00 : f32
    %83 = vector.broadcast %cst_35 : f32 to vector<8x128xf32>
    %84 = arith.addf %83, %82 : vector<8x128xf32>
    %85 = arith.mulf %74, %84 : vector<8x128xf32>
    %86 = arith.index_cast %c0_i32_26 : i32 to index
    %c0_36 = arith.constant 0 : index
    %c0_37 = arith.constant 0 : index
    %87 = vector.load %arg12[%86, %c0_36, %c0_37] : memref<1x128x32xf32, #tpu.memory_space<vmem>>, vector<1x128x32xf32>
    %88 = vector.shape_cast %87 : vector<1x128x32xf32> to vector<128x32xf32>
    %cst_38 = arith.constant dense<0.000000e+00> : vector<8x32xf32>
    %89 = tpu.matmul %85, %88, %cst_38 {dimension_numbers = #tpu.dot_dimension_numbers<[1], [0], [0], [1], [0, 0, 1, 1], [], []>} : vector<8x128xf32>, vector<128x32xf32>, vector<8x32xf32> -> vector<8x32xf32>
    %90 = arith.addf %63, %89 : vector<8x32xf32>
    %c1_i32_39 = arith.constant 1 : i32
    %91 = arith.addf %38, %90 : vector<8x32xf32>
    %c0_40 = arith.constant 0 : index
    %c0_41 = arith.constant 0 : index
    %92 = vector.load %arg13[%c0_40, %c0_41] : memref<1x32xf32, #tpu.memory_space<vmem>>, vector<1x32xf32>
    %93 = vector.broadcast %92 : vector<1x32xf32> to vector<8x32xf32>
    %94 = arith.addf %91, %93 : vector<8x32xf32>
    %95 = vector.shape_cast %94 : vector<8x32xf32> to vector<1x8x32xf32>
    %c0_42 = arith.constant 0 : index
    %c0_43 = arith.constant 0 : index
    %c0_44 = arith.constant 0 : index
    %96 = vector.load %arg14[%c0_42, %c0_43, %c0_44] : memref<1x8x32xf32, #tpu.memory_space<vmem>>, vector<1x8x32xf32>
    tpu.vector_store %arg14[%c0_42, %c0_43, %c0_44], %95 {strides = array<i32>} : memref<1x8x32xf32, #tpu.memory_space<vmem>>, vector<1x8x32xf32>,
    return
  }
  func.func @transform_0(%arg0: i32) -> (i32, i32, i32) {
    %c0_i32 = arith.constant 0 : i32
    %c0_i32_0 = arith.constant 0 : i32
    %c0_i32_1 = arith.constant 0 : i32
    return %arg0, %c0_i32, %c0_i32_0 : i32, i32, i32
  }
  func.func @transform_1(%arg0: i32) -> (i32, i32) {
    %c0_i32 = arith.constant 0 : i32
    %c0_i32_0 = arith.constant 0 : i32
    %c0_i32_1 = arith.constant 0 : i32
    return %c0_i32, %c0_i32_0 : i32, i32
  }
  func.func @transform_2(%arg0: i32) -> (i32, i32) {
    %c0_i32 = arith.constant 0 : i32
    %c0_i32_0 = arith.constant 0 : i32
    %c0_i32_1 = arith.constant 0 : i32
    return %c0_i32, %c0_i32_0 : i32, i32
  }
  func.func @transform_3(%arg0: i32) -> (i32, i32, i32) {
    %c0_i32 = arith.constant 0 : i32
    %c0_i32_0 = arith.constant 0 : i32
    %c0_i32_1 = arith.constant 0 : i32
    %c0_i32_2 = arith.constant 0 : i32
    return %c0_i32, %c0_i32_0, %c0_i32_1 : i32, i32, i32
  }
  func.func @transform_4(%arg0: i32) -> (i32, i32, i32) {
    %c0_i32 = arith.constant 0 : i32
    %c0_i32_0 = arith.constant 0 : i32
    %c0_i32_1 = arith.constant 0 : i32
    %c0_i32_2 = arith.constant 0 : i32
    return %c0_i32, %c0_i32_0, %c0_i32_1 : i32, i32, i32
  }
  func.func @transform_5(%arg0: i32) -> (i32, i32, i32) {
    %c0_i32 = arith.constant 0 : i32
    %c0_i32_0 = arith.constant 0 : i32
    %c0_i32_1 = arith.constant 0 : i32
    %c0_i32_2 = arith.constant 0 : i32
    return %c0_i32, %c0_i32_0, %c0_i32_1 : i32, i32, i32
  }
  func.func @transform_6(%arg0: i32) -> (i32, i32) {
    %c0_i32 = arith.constant 0 : i32
    %c0_i32_0 = arith.constant 0 : i32
    %c0_i32_1 = arith.constant 0 : i32
    return %c0_i32, %c0_i32_0 : i32, i32
  }
  func.func @transform_7(%arg0: i32) -> (i32, i32) {
    %c0_i32 = arith.constant 0 : i32
    %c0_i32_0 = arith.constant 0 : i32
    %c0_i32_1 = arith.constant 0 : i32
    return %c0_i32, %c0_i32_0 : i32, i32
  }
  func.func @transform_8(%arg0: i32) -> (i32, i32) {
    %c0_i32 = arith.constant 0 : i32
    %c0_i32_0 = arith.constant 0 : i32
    %c0_i32_1 = arith.constant 0 : i32
    return %c0_i32, %c0_i32_0 : i32, i32
  }
  func.func @transform_9(%arg0: i32) -> (i32, i32, i32) {
    %c0_i32 = arith.constant 0 : i32
    %c0_i32_0 = arith.constant 0 : i32
    %c0_i32_1 = arith.constant 0 : i32
    %c0_i32_2 = arith.constant 0 : i32
    return %c0_i32, %c0_i32_0, %c0_i32_1 : i32, i32, i32
  }
  func.func @transform_10(%arg0: i32) -> (i32, i32, i32) {
    %c0_i32 = arith.constant 0 : i32
    %c0_i32_0 = arith.constant 0 : i32
    %c0_i32_1 = arith.constant 0 : i32
    %c0_i32_2 = arith.constant 0 : i32
    return %c0_i32, %c0_i32_0, %c0_i32_1 : i32, i32, i32
  }
  func.func @transform_11(%arg0: i32) -> (i32, i32, i32) {
    %c0_i32 = arith.constant 0 : i32
    %c0_i32_0 = arith.constant 0 : i32
    %c0_i32_1 = arith.constant 0 : i32
    %c0_i32_2 = arith.constant 0 : i32
    return %c0_i32, %c0_i32_0, %c0_i32_1 : i32, i32, i32
  }
  func.func @transform_12(%arg0: i32) -> (i32, i32) {
    %c0_i32 = arith.constant 0 : i32
    %c0_i32_0 = arith.constant 0 : i32
    %c0_i32_1 = arith.constant 0 : i32
    return %c0_i32, %c0_i32_0 : i32, i32
  }
  func.func @transform_13(%arg0: i32) -> (i32, i32, i32) {
    %c0_i32 = arith.constant 0 : i32
    %c0_i32_0 = arith.constant 0 : i32
    %c0_i32_1 = arith.constant 0 : i32
    return %arg0, %c0_i32, %c0_i32_0 : i32, i32, i32
  }
}

</mosaic_0001>

<llo_original>
// kernel: tpu_custom_call.1
$region0: #{tpu_custom_call.1}
  #allocation0 [shape = 'u32[]', space=smem, size = 0x4, offset = 0x4, fixed_abs, tag = 'smem constant byte address 0x4 - core index']
  #allocation1 [shape = 'u32[144,128]{1,0:T(1,128)}', space=vmem, size = 0x12000, scoped, tag = 'internal scratch']
  %s0 = inlined_call_operand.vmem [shape: f32[2,8,32], index: 0, kind: input, shape index: {}]
  %s1 = inlined_call_operand.vmem [shape: f32[1,32], index: 1, kind: input, shape index: {}]
  %s2 = inlined_call_operand.vmem [shape: f32[1,32], index: 2, kind: input, shape index: {}]
  %s3 = inlined_call_operand.vmem [shape: f32[4,32,24], index: 3, kind: input, shape index: {}]
  %s4 = inlined_call_operand.vmem [shape: f32[4,1,24], index: 4, kind: input, shape index: {}]
  %s5 = inlined_call_operand.vmem [shape: f32[4,8,32], index: 5, kind: input, shape index: {}]
  %s6 = inlined_call_operand.vmem [shape: f32[1,32], index: 6, kind: input, shape index: {}]
  %s7 = inlined_call_operand.vmem [shape: f32[1,32], index: 7, kind: input, shape index: {}]
  %s8 = inlined_call_operand.vmem [shape: f32[1,32], index: 8, kind: input, shape index: {}]
  %s9 = inlined_call_operand.vmem [shape: f32[1,32,128], index: 9, kind: input, shape index: {}]
  %s10 = inlined_call_operand.vmem [shape: f32[1,1,128], index: 10, kind: input, shape index: {}]
  %s11 = inlined_call_operand.vmem [shape: f32[1,128,32], index: 11, kind: input, shape index: {}]
  %s12 = inlined_call_operand.vmem [shape: f32[1,32], index: 12, kind: input, shape index: {}]
  %s13 = inlined_call_operand.hbm [shape: f32[2,8,32], index: 13, kind: output, shape index: {}]
  %s14 = sld [smem:[#allocation0]]
  $region92: #{tpu_custom_call.1} parent=0
    _
  %s16 = ssub.s32 1, %s14
  %s17 = scalar_select 0, %s16, %s14
  $region1: #{tpu_custom_call.1} parent=0
    #allocation2 [shape = 'u8[8192]{0}', space=vmem, size = 0x2000, scoped, tag = 'output window, operand 0']
    #allocation3 [shape = 's32[2]{0}', space=sflag, size = 0x8, scoped, tag = 'scoped memory for tpu_custom_call.1']
    %18 = vsyncpa [#allocation3], 0
    %s19 = scalar_lea.sflag [#allocation3], 1
    %20 = vsyncpa %s19, 0
    loop: start=0, step=1, limit=4
    $region2: #{tpu_custom_call.1} parent=1 // loop_pre_header
      _
    $region3: #{tpu_custom_call.1} parent=1 // loop_header
      %s22 = sphi 0, %s26
      %p23 = scmp.ge.s32.totalorder %s22, 4
      %s32 = sphi 0, %s34
      %s35 = sphi 0, %s32
      %s36 = sphi 0, %s35
      %s52 = sphi 0, %s36
      %s56 = sphi 0, %s56
      %s58 = sphi 0, %s56
      %s59 = sphi 0, %s58
      %s73 = sphi 0, %s59
      %s77 = sphi 0, %s77
      %s79 = sphi 0, %s77
      %s80 = sphi 0, %s79
      %s94 = sphi 0, %s80
      %s98 = sphi 0, %s98
      %s100 = sphi 0, %s98
      %s101 = sphi 0, %s100
      %s115 = sphi 0, %s101
      %s119 = sphi 0, %s119
      %s121 = sphi 0, %s119
      %s122 = sphi 0, %s121
      %s136 = sphi 0, %s122
      %s140 = sphi 0, %s140
      %s142 = sphi 0, %s140
      %s143 = sphi 0, %s142
      %s157 = sphi 0, %s143
      %s161 = sphi 0, %s161
      %s163 = sphi 0, %s161
      %s164 = sphi 0, %s163
      %s178 = sphi 0, %s164
      %s182 = sphi 0, %s182
      %s184 = sphi 0, %s182
      %s185 = sphi 0, %s184
      %s199 = sphi 0, %s185
      %s203 = sphi 0, %s203
      %s205 = sphi 0, %s203
      %s206 = sphi 0, %s205
      %s220 = sphi 0, %s206
      %s224 = sphi 0, %s224
      %s226 = sphi 0, %s224
      %s227 = sphi 0, %s226
      %s241 = sphi 0, %s227
      %s245 = sphi 0, %s245
      %s247 = sphi 0, %s245
      %s248 = sphi 0, %s247
      %s262 = sphi 0, %s248
      %s266 = sphi 0, %s266
      %s268 = sphi 0, %s266
      %s269 = sphi 0, %s268
      %s283 = sphi 0, %s269
      %s287 = sphi 0, %s287
      %s289 = sphi 0, %s287
      %s290 = sphi 0, %s289
      %s304 = sphi 0, %s290
      %s310 = sphi 0, %s312
      %s313 = sphi 0, %s310
      %s314 = sphi 0, %s313
      %s330 = sphi 0, %s314
    $region4: #{tpu_custom_call.1} parent=1 // loop_header_branch
      %25 = sbr.rel (%p23) target = $region8
    $region5: #{tpu_custom_call.1} parent=1 // loop_body
      %s27 = ssub.s32 %s22, 1
      %s28 = ssub.s32 %s22, 2
      %s29 = sadd.s32 %s22, 1
      %s30 = ssub.s32 %s22, %s29
      %p31 = scmp.eq.s32.totalorder %s30, 0
      %s33 = sadd.s32 %s32, 1
      %s34 = scalar_select %p31, %s32, %s33
      %p37 = pneg %p31
      %p38 = scmp.eq.s32.totalorder %s22, 1
      %p39 = por %p37, %p38
      %p40 = scmp.ne.s32.totalorder %s32, %s35
      %p41 = scmp.eq.s32.totalorder %s22, 0
      %p42 = por %p40, %p41
      %p43 = scmp.ne.s32.totalorder %s32, %s35
      %p44 = scmp.eq.s32.totalorder %s27, 1
      %p45 = por %p43, %p44
      %p46 = scmp.ne.s32.totalorder %s35, %s36
      %p47 = scmp.eq.s32.totalorder %s27, 0
      %p48 = por %p46, %p47
      %p49 = scmp.ne.s32.totalorder %s35, %s36
      %p50 = scmp.eq.s32.totalorder %s28, 1
      %p51 = por %p49, %p50
      %p53 = scmp.ne.s32.totalorder %s36, %s52
      %p54 = scmp.eq.s32.totalorder %s28, 0
      %p55 = por %p53, %p54
      %s57 = sadd.s32 %s56, 1
      %p60 = scmp.eq.s32.totalorder %s22, 1
      %p61 = scmp.ne.s32.totalorder %s56, %s58
      %p62 = scmp.eq.s32.totalorder %s22, 0
      %p63 = por %p61, %p62
      %p64 = scmp.ne.s32.totalorder %s56, %s58
      %p65 = scmp.eq.s32.totalorder %s27, 1
      %p66 = por %p64, %p65
      %p67 = scmp.ne.s32.totalorder %s58, %s59
      %p68 = scmp.eq.s32.totalorder %s27, 0
      %p69 = por %p67, %p68
      %p70 = scmp.ne.s32.totalorder %s58, %s59
      %p71 = scmp.eq.s32.totalorder %s28, 1
      %p72 = por %p70, %p71
      %p74 = scmp.ne.s32.totalorder %s59, %s73
      %p75 = scmp.eq.s32.totalorder %s28, 0
      %p76 = por %p74, %p75
      %s78 = sadd.s32 %s77, 1
      %p81 = scmp.eq.s32.totalorder %s22, 1
      %p82 = scmp.ne.s32.totalorder %s77, %s79
      %p83 = scmp.eq.s32.totalorder %s22, 0
      %p84 = por %p82, %p83
      %p85 = scmp.ne.s32.totalorder %s77, %s79
      %p86 = scmp.eq.s32.totalorder %s27, 1
      %p87 = por %p85, %p86
      %p88 = scmp.ne.s32.totalorder %s79, %s80
      %p89 = scmp.eq.s32.totalorder %s27, 0
      %p90 = por %p88, %p89
      %p91 = scmp.ne.s32.totalorder %s79, %s80
      %p92 = scmp.eq.s32.totalorder %s28, 1
      %p93 = por %p91, %p92
      %p95 = scmp.ne.s32.totalorder %s80, %s94
      %p96 = scmp.eq.s32.totalorder %s28, 0
      %p97 = por %p95, %p96
      %s99 = sadd.s32 %s98, 1
      %p102 = scmp.eq.s32.totalorder %s22, 1
      %p103 = scmp.ne.s32.totalorder %s98, %s100
      %p104 = scmp.eq.s32.totalorder %s22, 0
      %p105 = por %p103, %p104
      %p106 = scmp.ne.s32.totalorder %s98, %s100
      %p107 = scmp.eq.s32.totalorder %s27, 1
      %p108 = por %p106, %p107
      %p109 = scmp.ne.s32.totalorder %s100, %s101
      %p110 = scmp.eq.s32.totalorder %s27, 0
      %p111 = por %p109, %p110
      %p112 = scmp.ne.s32.totalorder %s100, %s101
      %p113 = scmp.eq.s32.totalorder %s28, 1
      %p114 = por %p112, %p113
      %p116 = scmp.ne.s32.totalorder %s101, %s115
      %p117 = scmp.eq.s32.totalorder %s28, 0
      %p118 = por %p116, %p117
      %s120 = sadd.s32 %s119, 1
      %p123 = scmp.eq.s32.totalorder %s22, 1
      %p124 = scmp.ne.s32.totalorder %s119, %s121
      %p125 = scmp.eq.s32.totalorder %s22, 0
      %p126 = por %p124, %p125
      %p127 = scmp.ne.s32.totalorder %s119, %s121
      %p128 = scmp.eq.s32.totalorder %s27, 1
      %p129 = por %p127, %p128
      %p130 = scmp.ne.s32.totalorder %s121, %s122
      %p131 = scmp.eq.s32.totalorder %s27, 0
      %p132 = por %p130, %p131
      %p133 = scmp.ne.s32.totalorder %s121, %s122
      %p134 = scmp.eq.s32.totalorder %s28, 1
      %p135 = por %p133, %p134
      %p137 = scmp.ne.s32.totalorder %s122, %s136
      %p138 = scmp.eq.s32.totalorder %s28, 0
      %p139 = por %p137, %p138
      %s141 = sadd.s32 %s140, 1
      %p144 = scmp.eq.s32.totalorder %s22, 1
      %p145 = scmp.ne.s32.totalorder %s140, %s142
      %p146 = scmp.eq.s32.totalorder %s22, 0
      %p147 = por %p145, %p146
      %p148 = scmp.ne.s32.totalorder %s140, %s142
      %p149 = scmp.eq.s32.totalorder %s27, 1
      %p150 = por %p148, %p149
      %p151 = scmp.ne.s32.totalorder %s142, %s143
      %p152 = scmp.eq.s32.totalorder %s27, 0
      %p153 = por %p151, %p152
      %p154 = scmp.ne.s32.totalorder %s142, %s143
      %p155 = scmp.eq.s32.totalorder %s28, 1
      %p156 = por %p154, %p155
      %p158 = scmp.ne.s32.totalorder %s143, %s157
      %p159 = scmp.eq.s32.totalorder %s28, 0
      %p160 = por %p158, %p159
      %s162 = sadd.s32 %s161, 1
      %p165 = scmp.eq.s32.totalorder %s22, 1
      %p166 = scmp.ne.s32.totalorder %s161, %s163
      %p167 = scmp.eq.s32.totalorder %s22, 0
      %p168 = por %p166, %p167
      %p169 = scmp.ne.s32.totalorder %s161, %s163
      %p170 = scmp.eq.s32.totalorder %s27, 1
      %p171 = por %p169, %p170
      %p172 = scmp.ne.s32.totalorder %s163, %s164
      %p173 = scmp.eq.s32.totalorder %s27, 0
      %p174 = por %p172, %p173
      %p175 = scmp.ne.s32.totalorder %s163, %s164
      %p176 = scmp.eq.s32.totalorder %s28, 1
      %p177 = por %p175, %p176
      %p179 = scmp.ne.s32.totalorder %s164, %s178
      %p180 = scmp.eq.s32.totalorder %s28, 0
      %p181 = por %p179, %p180
      %s183 = sadd.s32 %s182, 1
      %p186 = scmp.eq.s32.totalorder %s22, 1
      %p187 = scmp.ne.s32.totalorder %s182, %s184
      %p188 = scmp.eq.s32.totalorder %s22, 0
      %p189 = por %p187, %p188
      %p190 = scmp.ne.s32.totalorder %s182, %s184
      %p191 = scmp.eq.s32.totalorder %s27, 1
      %p192 = por %p190, %p191
      %p193 = scmp.ne.s32.totalorder %s184, %s185
      %p194 = scmp.eq.s32.totalorder %s27, 0
      %p195 = por %p193, %p194
      %p196 = scmp.ne.s32.totalorder %s184, %s185
      %p197 = scmp.eq.s32.totalorder %s28, 1
      %p198 = por %p196, %p197
      %p200 = scmp.ne.s32.totalorder %s185, %s199
      %p201 = scmp.eq.s32.totalorder %s28, 0
      %p202 = por %p200, %p201
      %s204 = sadd.s32 %s203, 1
      %p207 = scmp.eq.s32.totalorder %s22, 1
      %p208 = scmp.ne.s32.totalorder %s203, %s205
      %p209 = scmp.eq.s32.totalorder %s22, 0
      %p210 = por %p208, %p209
      %p211 = scmp.ne.s32.totalorder %s203, %s205
      %p212 = scmp.eq.s32.totalorder %s27, 1
      %p213 = por %p211, %p212
      %p214 = scmp.ne.s32.totalorder %s205, %s206
      %p215 = scmp.eq.s32.totalorder %s27, 0
      %p216 = por %p214, %p215
      %p217 = scmp.ne.s32.totalorder %s205, %s206
      %p218 = scmp.eq.s32.totalorder %s28, 1
      %p219 = por %p217, %p218
      %p221 = scmp.ne.s32.totalorder %s206, %s220
      %p222 = scmp.eq.s32.totalorder %s28, 0
      %p223 = por %p221, %p222
      %s225 = sadd.s32 %s224, 1
      %p228 = scmp.eq.s32.totalorder %s22, 1
      %p229 = scmp.ne.s32.totalorder %s224, %s226
      %p230 = scmp.eq.s32.totalorder %s22, 0
      %p231 = por %p229, %p230
      %p232 = scmp.ne.s32.totalorder %s224, %s226
      %p233 = scmp.eq.s32.totalorder %s27, 1
      %p234 = por %p232, %p233
      %p235 = scmp.ne.s32.totalorder %s226, %s227
      %p236 = scmp.eq.s32.totalorder %s27, 0
      %p237 = por %p235, %p236
      %p238 = scmp.ne.s32.totalorder %s226, %s227
      %p239 = scmp.eq.s32.totalorder %s28, 1
      %p240 = por %p238, %p239
      %p242 = scmp.ne.s32.totalorder %s227, %s241
      %p243 = scmp.eq.s32.totalorder %s28, 0
      %p244 = por %p242, %p243
      %s246 = sadd.s32 %s245, 1
      %p249 = scmp.eq.s32.totalorder %s22, 1
      %p250 = scmp.ne.s32.totalorder %s245, %s247
      %p251 = scmp.eq.s32.totalorder %s22, 0
      %p252 = por %p250, %p251
      %p253 = scmp.ne.s32.totalorder %s245, %s247
      %p254 = scmp.eq.s32.totalorder %s27, 1
      %p255 = por %p253, %p254
      %p256 = scmp.ne.s32.totalorder %s247, %s248
      %p257 = scmp.eq.s32.totalorder %s27, 0
      %p258 = por %p256, %p257
      %p259 = scmp.ne.s32.totalorder %s247, %s248
      %p260 = scmp.eq.s32.totalorder %s28, 1
      %p261 = por %p259, %p260
      %p263 = scmp.ne.s32.totalorder %s248, %s262
      %p264 = scmp.eq.s32.totalorder %s28, 0
      %p265 = por %p263, %p264
      %s267 = sadd.s32 %s266, 1
      %p270 = scmp.eq.s32.totalorder %s22, 1
      %p271 = scmp.ne.s32.totalorder %s266, %s268
      %p272 = scmp.eq.s32.totalorder %s22, 0
      %p273 = por %p271, %p272
      %p274 = scmp.ne.s32.totalorder %s266, %s268
      %p275 = scmp.eq.s32.totalorder %s27, 1
      %p276 = por %p274, %p275
      %p277 = scmp.ne.s32.totalorder %s268, %s269
      %p278 = scmp.eq.s32.totalorder %s27, 0
      %p279 = por %p277, %p278
      %p280 = scmp.ne.s32.totalorder %s268, %s269
      %p281 = scmp.eq.s32.totalorder %s28, 1
      %p282 = por %p280, %p281
      %p284 = scmp.ne.s32.totalorder %s269, %s283
      %p285 = scmp.eq.s32.totalorder %s28, 0
      %p286 = por %p284, %p285
      %s288 = sadd.s32 %s287, 1
      %p291 = scmp.eq.s32.totalorder %s22, 1
      %p292 = scmp.ne.s32.totalorder %s287, %s289
      %p293 = scmp.eq.s32.totalorder %s22, 0
      %p294 = por %p292, %p293
      %p295 = scmp.ne.s32.totalorder %s287, %s289
      %p296 = scmp.eq.s32.totalorder %s27, 1
      %p297 = por %p295, %p296
      %p298 = scmp.ne.s32.totalorder %s289, %s290
      %p299 = scmp.eq.s32.totalorder %s27, 0
      %p300 = por %p298, %p299
      %p301 = scmp.ne.s32.totalorder %s289, %s290
      %p302 = scmp.eq.s32.totalorder %s28, 1
      %p303 = por %p301, %p302
      %p305 = scmp.ne.s32.totalorder %s290, %s304
      %p306 = scmp.eq.s32.totalorder %s28, 0
      %p307 = por %p305, %p306
      %s308 = ssub.s32 %s22, %s29
      %p309 = scmp.eq.s32.totalorder %s308, 0
      %s311 = sadd.s32 %s310, 1
      %s312 = scalar_select %p309, %s310, %s311
      %p315 = pneg %p309
      %p316 = scmp.eq.s32.totalorder %s22, 1
      %p317 = por %p315, %p316
      %p318 = scmp.ne.s32.totalorder %s310, %s313
      %p319 = scmp.eq.s32.totalorder %s22, 0
      %p320 = por %p318, %p319
      %p321 = scmp.ne.s32.totalorder %s310, %s313
      %p322 = scmp.eq.s32.totalorder %s27, 1
      %p323 = por %p321, %p322
      %p324 = scmp.ne.s32.totalorder %s313, %s314
      %p325 = scmp.eq.s32.totalorder %s27, 0
      %p326 = por %p324, %p325
      %p327 = scmp.ne.s32.totalorder %s313, %s314
      %p328 = scmp.eq.s32.totalorder %s28, 1
      %p329 = por %p327, %p328
      %p331 = scmp.ne.s32.totalorder %s314, %s330
      %p332 = scmp.eq.s32.totalorder %s28, 0
      %p333 = por %p331, %p332
      %p334 = scmp.le.s32.totalorder 1, %s22
      %p335 = scmp.lt.s32.totalorder %s22, 3
      %p336 = pnand %p334, %p335
      %p337 = pneg %p336
      // Predicated region
      $region9: #{tpu_custom_call.1} parent=5 // pred_check
        _
      $region10: #{tpu_custom_call.1} parent=5 // pred_check_branch
        %339 = sbr.rel (%p336) target = $region12
      $region11: #{tpu_custom_call.1} parent=5 // pred_region
        %s340 = ssub.s32 %s22, 1
        // Predicated region
        $region13: #{tpu_custom_call.1} parent=11 // pred_check
          %p341 = pneg %p69
        $region14: #{tpu_custom_call.1} parent=11 // pred_check_branch
          %343 = sbr.rel (%p341) target = $region16
        $region15: #{tpu_custom_call.1} parent=11 // pred_region
          _
        $region16: #{tpu_custom_call.1} parent=11 // pred_fallthru
          _
        // Predicated region
        $region17: #{tpu_custom_call.1} parent=11 // pred_check
          %p344 = pneg %p90
        $region18: #{tpu_custom_call.1} parent=11 // pred_check_branch
          %346 = sbr.rel (%p344) target = $region20
        $region19: #{tpu_custom_call.1} parent=11 // pred_region
          _
        $region20: #{tpu_custom_call.1} parent=11 // pred_fallthru
          _
        // Predicated region
        $region21: #{tpu_custom_call.1} parent=11 // pred_check
          %p347 = pneg %p111
        $region22: #{tpu_custom_call.1} parent=11 // pred_check_branch
          %349 = sbr.rel (%p347) target = $region24
        $region23: #{tpu_custom_call.1} parent=11 // pred_region
          _
        $region24: #{tpu_custom_call.1} parent=11 // pred_fallthru
          _
        // Predicated region
        $region25: #{tpu_custom_call.1} parent=11 // pred_check
          %p350 = pneg %p132
        $region26: #{tpu_custom_call.1} parent=11 // pred_check_branch
          %352 = sbr.rel (%p350) target = $region28
        $region27: #{tpu_custom_call.1} parent=11 // pred_region
          _
        $region28: #{tpu_custom_call.1} parent=11 // pred_fallthru
          _
        // Predicated region
        $region29: #{tpu_custom_call.1} parent=11 // pred_check
          %p353 = pneg %p153
        $region30: #{tpu_custom_call.1} parent=11 // pred_check_branch
          %355 = sbr.rel (%p353) target = $region32
        $region31: #{tpu_custom_call.1} parent=11 // pred_region
          _
        $region32: #{tpu_custom_call.1} parent=11 // pred_fallthru
          _
        // Predicated region
        $region33: #{tpu_custom_call.1} parent=11 // pred_check
          %p356 = pneg %p174
        $region34: #{tpu_custom_call.1} parent=11 // pred_check_branch
          %358 = sbr.rel (%p356) target = $region36
        $region35: #{tpu_custom_call.1} parent=11 // pred_region
          _
        $region36: #{tpu_custom_call.1} parent=11 // pred_fallthru
          _
        // Predicated region
        $region37: #{tpu_custom_call.1} parent=11 // pred_check
          %p359 = pneg %p195
        $region38: #{tpu_custom_call.1} parent=11 // pred_check_branch
          %361 = sbr.rel (%p359) target = $region40
        $region39: #{tpu_custom_call.1} parent=11 // pred_region
          _
        $region40: #{tpu_custom_call.1} parent=11 // pred_fallthru
          _
        // Predicated region
        $region41: #{tpu_custom_call.1} parent=11 // pred_check
          %p362 = pneg %p216
        $region42: #{tpu_custom_call.1} parent=11 // pred_check_branch
          %364 = sbr.rel (%p362) target = $region44
        $region43: #{tpu_custom_call.1} parent=11 // pred_region
          _
        $region44: #{tpu_custom_call.1} parent=11 // pred_fallthru
          _
        // Predicated region
        $region45: #{tpu_custom_call.1} parent=11 // pred_check
          %p365 = pneg %p237
        $region46: #{tpu_custom_call.1} parent=11 // pred_check_branch
          %367 = sbr.rel (%p365) target = $region48
        $region47: #{tpu_custom_call.1} parent=11 // pred_region
          _
        $region48: #{tpu_custom_call.1} parent=11 // pred_fallthru
          _
        // Predicated region
        $region49: #{tpu_custom_call.1} parent=11 // pred_check
          %p368 = pneg %p258
        $region50: #{tpu_custom_call.1} parent=11 // pred_check_branch
          %370 = sbr.rel (%p368) target = $region52
        $region51: #{tpu_custom_call.1} parent=11 // pred_region
          _
        $region52: #{tpu_custom_call.1} parent=11 // pred_fallthru
          _
        // Predicated region
        $region53: #{tpu_custom_call.1} parent=11 // pred_check
          %p371 = pneg %p279
        $region54: #{tpu_custom_call.1} parent=11 // pred_check_branch
          %373 = sbr.rel (%p371) target = $region56
        $region55: #{tpu_custom_call.1} parent=11 // pred_region
          _
        $region56: #{tpu_custom_call.1} parent=11 // pred_fallthru
          _
        // Predicated region
        $region57: #{tpu_custom_call.1} parent=11 // pred_check
          %p374 = pneg %p300
        $region58: #{tpu_custom_call.1} parent=11 // pred_check_branch
          %376 = sbr.rel (%p374) target = $region60
        $region59: #{tpu_custom_call.1} parent=11 // pred_region
          _
        $region60: #{tpu_custom_call.1} parent=11 // pred_fallthru
          _
      $region12: #{tpu_custom_call.1} parent=5 // pred_fallthru
        _
      %p377 = scmp.lt.s32.totalorder %s22, 2
      // Predicated region
      $region61: #{tpu_custom_call.1} parent=5 // pred_check
        %p378 = pneg %p377
      $region62: #{tpu_custom_call.1} parent=5 // pred_check_branch
        %380 = sbr.rel (%p378) target = $region64
      $region63: #{tpu_custom_call.1} parent=5 // pred_region
        // Predicated region
        $region65: #{tpu_custom_call.1} parent=63 // pred_check
          %p381 = pneg %p42
        $region66: #{tpu_custom_call.1} parent=63 // pred_check_branch
          %383 = sbr.rel (%p381) target = $region68
        $region67: #{tpu_custom_call.1} parent=63 // pred_region
          %p384 = scmp.lt.s32.totalorder %s22, 1
          %s385 = scalar_select %p384, %s22, 1
          %s386 = smul.addr %s385, 8
          %s387 = scalar_lea.vmem %s0, %s386
        $region68: #{tpu_custom_call.1} parent=63 // pred_fallthru
          _
      $region64: #{tpu_custom_call.1} parent=5 // pred_fallthru
        _
      %p388 = scmp.le.s32.totalorder 1, %s22
      %p389 = scmp.lt.s32.totalorder %s22, 3
      %p390 = pnand %p388, %p389
      %p391 = pneg %p390
      // Predicated region
      $region69: #{tpu_custom_call.1} parent=5 // pred_check
        _
      $region70: #{tpu_custom_call.1} parent=5 // pred_check_branch
        %393 = sbr.rel (%p390) target = $region72
      $region71: #{tpu_custom_call.1} parent=5 // pred_region
        %s394 = ssub.s32 %s22, 1
        %p395 = scmp.lt.s32.totalorder %s27, 1
        %s396 = scalar_select %p395, %s27, 1
        %s397 = smul.addr %s396, 8
        %s398 = scalar_lea.vmem %s0, %s397
        %p399 = pneg %p48
        %p400 = pneg %p45
        %p401 = pneg %p69
        %p402 = pneg %p66
        %p403 = pneg %p90
        %p404 = pneg %p87
        %p405 = pneg %p111
        %p406 = pneg %p108
        %p407 = pneg %p132
        %p408 = pneg %p129
        %p409 = pneg %p153
        %p410 = pneg %p150
        %p411 = pneg %p174
        %p412 = pneg %p171
        %p413 = pneg %p195
        %p414 = pneg %p192
        %p415 = pneg %p216
        %p416 = pneg %p213
        %p417 = pneg %p237
        %p418 = pneg %p234
        %p419 = pneg %p258
        %p420 = pneg %p255
        %p421 = pneg %p279
        %p422 = pneg %p276
        %p423 = pneg %p300
        %p424 = pneg %p297
        %p425 = pneg %p326
        %p426 = pneg %p323
        %s427 = sand.u32 %s313, 1
        %s428 = scalar_lea.sflag [#allocation3], %s427
        %s429 = sand.u32 %s313, 1
        %s430 = smul.addr %s429, 8
        %s431 = scalar_lea.vmem [#allocation2], %s430
        %p432 = scmp.lt.s32.totalorder %s27, 1
        %s433 = scalar_select %p432, %s27, 1
        %s434 = smul.addr %s433, 8
        %s435 = scalar_lea.vmem %s0, %s434
        %v436 = vld [vmem:[%s435] sm:$0xff]
        %v437 = vld [vmem:[%s1] sm:$0x1]
        %v438 = vld [vmem:[%s2] sm:$0x1]
        %vm439 = vcmask 261120
        %v440 = vsel %vm439, %v436, 0.0
        %441 = vadd.xlane.f32.xlu0 %v440
        %v442 = vpop.xlane.xlu0 %441
        %v443 = vrcp.pop 32.0
        %v444 = vmul.f32 %v442, %v443
        %v445 = vsub.f32 %v436, %v444
        %v446 = vmul.f32 %v445, %v445
        %v447 = vsel %vm439, %v446, 0.0
        %448 = vadd.xlane.f32.xlu0 %v447
        %v449 = vpop.xlane.xlu0 %448
        %v450 = vmul.f32 %v449, %v443
        %v451 = vadd.f32 %v450, 1e-05
        %v452 = vrsqrt.pop %v451
        %v453 = vmul.f32 %v445, %v452
        %v455 = vlaneseq
        %v456 = vshrl.u32 %v455, 7
        %v457 = vsub.s32 0, %v456
        %v458 = vrot.slane %v437, %v457
        %v460 = vmul.f32 %v453, %v458
        %v462 = vlaneseq
        %v463 = vshrl.u32 %v462, 7
        %v464 = vsub.s32 0, %v463
        %v465 = vrot.slane %v438, %v464
        %v467 = vadd.f32 %v460, %v465
        %v468 = vlaneseq
        %v469 = vshrl.u32 %v468, 7
        %v470 = vlaneseq
        %v471 = vand.u32 %v470, 127
        %vm472 = vcmp.le.s32.totalorder %v471, %v469
        %v473 = vsel %vm472, 0.0, -1e+30
        loop: start=0, step=1, limit=4
        $region73: #{tpu_custom_call.1} parent=71 // loop_pre_header
          _
        $region74: #{tpu_custom_call.1} parent=71 // loop_header
          %s475 = sphi 0, %s479
          %p476 = scmp.ge.s32.totalorder %s475, 4
          %v480 = vphi 0.0, %v809
        $region75: #{tpu_custom_call.1} parent=71 // loop_header_branch
          %478 = sbr.rel (%p476) target = $region79
        $region76: #{tpu_custom_call.1} parent=71 // loop_body
          %s481 = smul.u32 %s475, 32
          %s482 = scalar_lea.vmem %s3, %s481
          %v483 = vld [vmem:[%s482] sm:$0xff]
          %v484 = vld [vmem:[%s482 + $0x8] sm:$0xff]
          %v485 = vld [vmem:[%s482 + $0x10] sm:$0xff]
          %v486 = vld [vmem:[%s482 + $0x18] sm:$0xff]
          %s487 = scalar_lea.vmem %s4, %s475
          %v488 = vld [vmem:[%s487] sm:$0x1]
          %v490 = vlaneseq
          %v491 = vshrl.u32 %v490, 7
          %v492 = vsub.s32 0, %v491
          %v493 = vrot.slane %v488, %v492
          %v496 = vsel %vm439, %v467, 0
          %498 = vmatprep.subr.mxu0 0.0
          %499 = vmatpush1.msra.mxu0 %v483
          %500 = vmatprep.subr.mxu0 0.0
          %501 = vmatpush1.msra.mxu0 %v484
          %502 = vmatprep.subr.mxu0 0.0
          %503 = vmatpush1.msra.mxu0 %v485
          %504 = vmatprep.subr.mxu0 0.0
          %505 = vmatpush1.msra.mxu0 %v486
          %506 = vmatprep.subr.mxu0 0.0
          %507 = vmatpush1.msra.mxu0 0.0
          %508 = vmatprep.subr.mxu0 0.0
          %509 = vmatpush1.msra.mxu0 0.0
          %510 = vmatprep.subr.mxu0 0.0
          %511 = vmatpush1.msra.mxu0 0.0
          %512 = vmatprep.subr.mxu0 0.0
          %513 = vmatpush1.msra.mxu0 0.0
          %514 = vmatprep.subr.mxu0 0.0
          %515 = vmatpush1.msra.mxu0 0.0
          %516 = vmatprep.subr.mxu0 0.0
          %517 = vmatpush1.msra.mxu0 0.0
          %518 = vmatprep.subr.mxu0 0.0
          %519 = vmatpush1.msra.mxu0 0.0
          %520 = vmatprep.subr.mxu0 0.0
          %521 = vmatpush1.msra.mxu0 0.0
          %522 = vmatprep.subr.mxu0 0.0
          %523 = vmatpush1.msra.mxu0 0.0
          %524 = vmatprep.subr.mxu0 0.0
          %525 = vmatpush1.msra.mxu0 0.0
          %526 = vmatprep.subr.mxu0 0.0
          %527 = vmatpush1.msra.mxu0 0.0
          %528 = vmatprep.subr.mxu0 0.0
          %529 = vmatpush1.msra.mxu0 0.0
          %530 = vmatprep.subr.mxu0 0.0
          %531 = vmatpush1.msra.mxu0 0.0
          %532 = vmatprep.subr.mxu0 0.0
          %533 = vmatpush1.msra.mxu0 0.0
          %534 = vmatprep.subr.mxu0 0.0
          %535 = vmatpush1.msra.mxu0 0.0
          %536 = vmatprep.subr.mxu0 0.0
          %537 = vmatpush1.msra.mxu0 0.0
          %538 = vmatprep.subr.mxu0 0.0
          %539 = vmatpush1.msra.mxu0 0.0
          %540 = vmatprep.subr.mxu0 0.0
          %541 = vmatpush1.msra.mxu0 0.0
          %542 = vmatprep.subr.mxu0 0.0
          %543 = vmatpush1.msra.mxu0 0.0
          %544 = vmatprep.subr.mxu0 0.0
          %545 = vmatpush1.msra.mxu0 0.0
          %546 = vmatprep.subr.mxu0 0.0
          %547 = vmatpush1.msra.mxu0 0.0
          %548 = vmatprep.subr.mxu0 0.0
          %549 = vmatpush1.msra.mxu0 0.0
          %550 = vmatprep.subr.mxu0 0.0
          %551 = vmatpush1.msra.mxu0 0.0
          %552 = vmatprep.subr.mxu0 0.0
          %553 = vmatpush1.msra.mxu0 0.0
          %554 = vmatprep.subr.mxu0 0.0
          %555 = vmatpush1.msra.mxu0 0.0
          %556 = vmatprep.subr.mxu0 0.0
          %557 = vmatpush1.msra.mxu0 0.0
          %558 = vmatprep.subr.mxu0 0.0
          %559 = vmatpush1.msra.mxu0 0.0
          %560 = vmatprep.subr.mxu0 0.0
          %561 = vmatpush1.msra.mxu0 0.0
          %562 = vmatprep.mubr.f32.mxu0 0.0
          %563 = vmatmul.mubr.f32.gmra.mrb[0].mxu0 %v496
          %v564 = vpop.f32.mrb[0].mxu0
          %v565 = vadd.f32 %v493, %v564
          %v566 = vpop.f32.mrb[0].mxu0
          %567 = vdwg.mxu0
          %569 = vrot.lane.b32.xlu0 %v565, 120
          %v570 = vpop.permute.xlu0 %569
          %vm571 = vcmask 64512
          %v572 = vsel %vm571, %v565, 0
          %v574 = vsel %vm571, %v570, 0
          %576 = vmatprep.subr.mxu0 0.0
          %577 = vmatpush1.xpose.msra.mxu0 %v574
          %578 = vmatprep.subr.mxu0 0.0
          %579 = vmatpush1.xpose.msra.mxu0 0.0
          %580 = vmatprep.subr.mxu0 0.0
          %581 = vmatpush1.xpose.msra.mxu0 0.0
          %582 = vmatprep.subr.mxu0 0.0
          %583 = vmatpush1.xpose.msra.mxu0 0.0
          %584 = vmatprep.subr.mxu0 0.0
          %585 = vmatpush1.xpose.msra.mxu0 0.0
          %586 = vmatprep.subr.mxu0 0.0
          %587 = vmatpush1.xpose.msra.mxu0 0.0
          %588 = vmatprep.subr.mxu0 0.0
          %589 = vmatpush1.xpose.msra.mxu0 0.0
          %590 = vmatprep.subr.mxu0 0.0
          %591 = vmatpush1.xpose.msra.mxu0 0.0
          %592 = vmatprep.subr.mxu0 0.0
          %593 = vmatpush1.xpose.msra.mxu0 0.0
          %594 = vmatprep.subr.mxu0 0.0
          %595 = vmatpush1.xpose.msra.mxu0 0.0
          %596 = vmatprep.subr.mxu0 0.0
          %597 = vmatpush1.xpose.msra.mxu0 0.0
          %598 = vmatprep.subr.mxu0 0.0
          %599 = vmatpush1.xpose.msra.mxu0 0.0
          %600 = vmatprep.subr.mxu0 0.0
          %601 = vmatpush1.xpose.msra.mxu0 0.0
          %602 = vmatprep.subr.mxu0 0.0
          %603 = vmatpush1.xpose.msra.mxu0 0.0
          %604 = vmatprep.subr.mxu0 0.0
          %605 = vmatpush1.xpose.msra.mxu0 0.0
          %606 = vmatprep.subr.mxu0 0.0
          %607 = vmatpush1.xpose.msra.mxu0 0.0
          %608 = vmatprep.subr.mxu0 0.0
          %609 = vmatpush1.xpose.msra.mxu0 0.0
          %610 = vmatprep.subr.mxu0 0.0
          %611 = vmatpush1.xpose.msra.mxu0 0.0
          %612 = vmatprep.subr.mxu0 0.0
          %613 = vmatpush1.xpose.msra.mxu0 0.0
          %614 = vmatprep.subr.mxu0 0.0
          %615 = vmatpush1.xpose.msra.mxu0 0.0
          %616 = vmatprep.subr.mxu0 0.0
          %617 = vmatpush1.xpose.msra.mxu0 0.0
          %618 = vmatprep.subr.mxu0 0.0
          %619 = vmatpush1.xpose.msra.mxu0 0.0
          %620 = vmatprep.subr.mxu0 0.0
          %621 = vmatpush1.xpose.msra.mxu0 0.0
          %622 = vmatprep.subr.mxu0 0.0
          %623 = vmatpush1.xpose.msra.mxu0 0.0
          %624 = vmatprep.subr.mxu0 0.0
          %625 = vmatpush1.xpose.msra.mxu0 0.0
          %626 = vmatprep.subr.mxu0 0.0
          %627 = vmatpush1.xpose.msra.mxu0 0.0
          %628 = vmatprep.subr.mxu0 0.0
          %629 = vmatpush1.xpose.msra.mxu0 0.0
          %630 = vmatprep.subr.mxu0 0.0
          %631 = vmatpush1.xpose.msra.mxu0 0.0
          %632 = vmatprep.subr.mxu0 0.0
          %633 = vmatpush1.xpose.msra.mxu0 0.0
          %634 = vmatprep.subr.mxu0 0.0
          %635 = vmatpush1.xpose.msra.mxu0 0.0
          %636 = vmatprep.subr.mxu0 0.0
          %637 = vmatpush1.xpose.msra.mxu0 0.0
          %638 = vmatprep.subr.mxu0 0.0
          %639 = vmatpush1.xpose.msra.mxu0 0.0
          %640 = vmatprep.mubr.f32.mxu0 0.0
          %641 = vmatmul.mubr.f32.gmra.mrb[0].mxu0 %v572
          %v642 = vpop.f32.mrb[0].mxu0
          %v643 = vadd.f32 %v473, %v642
          %v644 = vpop.f32.mrb[0].mxu0
          %645 = vdwg.mxu0
          %v646 = vsel %vm571, %v643, -inf
          %647 = vmax.xlane.f32.xlu0 %v646
          %v648 = vpop.xlane.xlu0 %647
          %v649 = vsub.f32 %v643, %v648
          %v650 = vmul.f32 %v649, 1.442695
          %v651 = vpow.pop %v650
          %v652 = vsel %vm571, %v651, 0.0
          %653 = vadd.xlane.f32.xlu0 %v652
          %v654 = vpop.xlane.xlu0 %653
          %v655 = vrcp.pop %v654
          %v656 = vmul.f32 %v651, %v655
          %657 = vrot.lane.b32.xlu0 %v565, 112
          %v658 = vpop.permute.xlu0 %657
          %v661 = vsel %vm571, %v656, 0
          %663 = vmatprep.subr.mxu0 0.0
          %664 = vmatpush1.msra.mxu0 %v658
          %665 = vmatprep.subr.mxu0 0.0
          %666 = vmatpush1.msra.mxu0 0.0
          %667 = vmatprep.subr.mxu0 0.0
          %668 = vmatpush1.msra.mxu0 0.0
          %669 = vmatprep.subr.mxu0 0.0
          %670 = vmatpush1.msra.mxu0 0.0
          %671 = vmatprep.subr.mxu0 0.0
          %672 = vmatpush1.msra.mxu0 0.0
          %673 = vmatprep.subr.mxu0 0.0
          %674 = vmatpush1.msra.mxu0 0.0
          %675 = vmatprep.subr.mxu0 0.0
          %676 = vmatpush1.msra.mxu0 0.0
          %677 = vmatprep.subr.mxu0 0.0
          %678 = vmatpush1.msra.mxu0 0.0
          %679 = vmatprep.subr.mxu0 0.0
          %680 = vmatpush1.msra.mxu0 0.0
          %681 = vmatprep.subr.mxu0 0.0
          %682 = vmatpush1.msra.mxu0 0.0
          %683 = vmatprep.subr.mxu0 0.0
          %684 = vmatpush1.msra.mxu0 0.0
          %685 = vmatprep.subr.mxu0 0.0
          %686 = vmatpush1.msra.mxu0 0.0
          %687 = vmatprep.subr.mxu0 0.0
          %688 = vmatpush1.msra.mxu0 0.0
          %689 = vmatprep.subr.mxu0 0.0
          %690 = vmatpush1.msra.mxu0 0.0
          %691 = vmatprep.subr.mxu0 0.0
          %692 = vmatpush1.msra.mxu0 0.0
          %693 = vmatprep.subr.mxu0 0.0
          %694 = vmatpush1.msra.mxu0 0.0
          %695 = vmatprep.subr.mxu0 0.0
          %696 = vmatpush1.msra.mxu0 0.0
          %697 = vmatprep.subr.mxu0 0.0
          %698 = vmatpush1.msra.mxu0 0.0
          %699 = vmatprep.subr.mxu0 0.0
          %700 = vmatpush1.msra.mxu0 0.0
          %701 = vmatprep.subr.mxu0 0.0
          %702 = vmatpush1.msra.mxu0 0.0
          %703 = vmatprep.subr.mxu0 0.0
          %704 = vmatpush1.msra.mxu0 0.0
          %705 = vmatprep.subr.mxu0 0.0
          %706 = vmatpush1.msra.mxu0 0.0
          %707 = vmatprep.subr.mxu0 0.0
          %708 = vmatpush1.msra.mxu0 0.0
          %709 = vmatprep.subr.mxu0 0.0
          %710 = vmatpush1.msra.mxu0 0.0
          %711 = vmatprep.subr.mxu0 0.0
          %712 = vmatpush1.msra.mxu0 0.0
          %713 = vmatprep.subr.mxu0 0.0
          %714 = vmatpush1.msra.mxu0 0.0
          %715 = vmatprep.subr.mxu0 0.0
          %716 = vmatpush1.msra.mxu0 0.0
          %717 = vmatprep.subr.mxu0 0.0
          %718 = vmatpush1.msra.mxu0 0.0
          %719 = vmatprep.subr.mxu0 0.0
          %720 = vmatpush1.msra.mxu0 0.0
          %721 = vmatprep.subr.mxu0 0.0
          %722 = vmatpush1.msra.mxu0 0.0
          %723 = vmatprep.subr.mxu0 0.0
          %724 = vmatpush1.msra.mxu0 0.0
          %725 = vmatprep.subr.mxu0 0.0
          %726 = vmatpush1.msra.mxu0 0.0
          %727 = vmatprep.mubr.f32.mxu0 0.0
          %728 = vmatmul.mubr.f32.gmra.mrb[0].mxu0 %v661
          %v729 = vpop.f32.mrb[0].mxu0
          %v730 = vadd.f32 0.0, %v729
          %v731 = vpop.f32.mrb[0].mxu0
          %732 = vdwg.mxu0
          %s733 = smul.u32 %s475, 8
          %s734 = scalar_lea.vmem %s5, %s733
          %v735 = vld [vmem:[%s734] sm:$0xff]
          %v737 = vsel %vm571, %v730, 0
          %739 = vmatprep.subr.mxu0 0.0
          %740 = vmatpush1.msra.mxu0 %v735
          %741 = vmatprep.subr.mxu0 0.0
          %742 = vmatpush1.msra.mxu0 0.0
          %743 = vmatprep.subr.mxu0 0.0
          %744 = vmatpush1.msra.mxu0 0.0
          %745 = vmatprep.subr.mxu0 0.0
          %746 = vmatpush1.msra.mxu0 0.0
          %747 = vmatprep.subr.mxu0 0.0
          %748 = vmatpush1.msra.mxu0 0.0
          %749 = vmatprep.subr.mxu0 0.0
          %750 = vmatpush1.msra.mxu0 0.0
          %751 = vmatprep.subr.mxu0 0.0
          %752 = vmatpush1.msra.mxu0 0.0
          %753 = vmatprep.subr.mxu0 0.0
          %754 = vmatpush1.msra.mxu0 0.0
          %755 = vmatprep.subr.mxu0 0.0
          %756 = vmatpush1.msra.mxu0 0.0
          %757 = vmatprep.subr.mxu0 0.0
          %758 = vmatpush1.msra.mxu0 0.0
          %759 = vmatprep.subr.mxu0 0.0
          %760 = vmatpush1.msra.mxu0 0.0
          %761 = vmatprep.subr.mxu0 0.0
          %762 = vmatpush1.msra.mxu0 0.0
          %763 = vmatprep.subr.mxu0 0.0
          %764 = vmatpush1.msra.mxu0 0.0
          %765 = vmatprep.subr.mxu0 0.0
          %766 = vmatpush1.msra.mxu0 0.0
          %767 = vmatprep.subr.mxu0 0.0
          %768 = vmatpush1.msra.mxu0 0.0
          %769 = vmatprep.subr.mxu0 0.0
          %770 = vmatpush1.msra.mxu0 0.0
          %771 = vmatprep.subr.mxu0 0.0
          %772 = vmatpush1.msra.mxu0 0.0
          %773 = vmatprep.subr.mxu0 0.0
          %774 = vmatpush1.msra.mxu0 0.0
          %775 = vmatprep.subr.mxu0 0.0
          %776 = vmatpush1.msra.mxu0 0.0
          %777 = vmatprep.subr.mxu0 0.0
          %778 = vmatpush1.msra.mxu0 0.0
          %779 = vmatprep.subr.mxu0 0.0
          %780 = vmatpush1.msra.mxu0 0.0
          %781 = vmatprep.subr.mxu0 0.0
          %782 = vmatpush1.msra.mxu0 0.0
          %783 = vmatprep.subr.mxu0 0.0
          %784 = vmatpush1.msra.mxu0 0.0
          %785 = vmatprep.subr.mxu0 0.0
          %786 = vmatpush1.msra.mxu0 0.0
          %787 = vmatprep.subr.mxu0 0.0
          %788 = vmatpush1.msra.mxu0 0.0
          %789 = vmatprep.subr.mxu0 0.0
          %790 = vmatpush1.msra.mxu0 0.0
          %791 = vmatprep.subr.mxu0 0.0
          %792 = vmatpush1.msra.mxu0 0.0
          %793 = vmatprep.subr.mxu0 0.0
          %794 = vmatpush1.msra.mxu0 0.0
          %795 = vmatprep.subr.mxu0 0.0
          %796 = vmatpush1.msra.mxu0 0.0
          %797 = vmatprep.subr.mxu0 0.0
          %798 = vmatpush1.msra.mxu0 0.0
          %799 = vmatprep.subr.mxu0 0.0
          %800 = vmatpush1.msra.mxu0 0.0
          %801 = vmatprep.subr.mxu0 0.0
          %802 = vmatpush1.msra.mxu0 0.0
          %803 = vmatprep.mubr.f32.mxu0 0.0
          %804 = vmatmul.mubr.f32.gmra.mrb[0].mxu0 %v737
          %v805 = vpop.f32.mrb[0].mxu0
          %v806 = vadd.f32 0.0, %v805
          %v807 = vpop.f32.mrb[0].mxu0
          %808 = vdwg.mxu0
          %v809 = vadd.f32 %v480, %v806
        $region77: #{tpu_custom_call.1} parent=71 // loop_footer
          %s479 = sadd.s32 1, %s475
        $region78: #{tpu_custom_call.1} parent=71 // loop_footer_branch
          %474 = sbr.rel target = $region74
        $region79: #{tpu_custom_call.1} parent=71 // loop_exit
          _
        %v810 = vadd.f32 %v436, %v480
        %v811 = vld [vmem:[%s6] sm:$0x1]
        %v813 = vlaneseq
        %v814 = vshrl.u32 %v813, 7
        %v815 = vsub.s32 0, %v814
        %v816 = vrot.slane %v811, %v815
        %v818 = vadd.f32 %v810, %v816
        %v819 = vld [vmem:[%s7] sm:$0x1]
        %v820 = vld [vmem:[%s8] sm:$0x1]
        %v821 = vsel %vm439, %v818, 0.0
        %822 = vadd.xlane.f32.xlu0 %v821
        %v823 = vpop.xlane.xlu0 %822
        %v824 = vmul.f32 %v823, %v443
        %v825 = vsub.f32 %v818, %v824
        %v826 = vmul.f32 %v825, %v825
        %v827 = vsel %vm439, %v826, 0.0
        %828 = vadd.xlane.f32.xlu0 %v827
        %v829 = vpop.xlane.xlu0 %828
        %v830 = vmul.f32 %v829, %v443
        %v831 = vadd.f32 %v830, 1e-05
        %v832 = vrsqrt.pop %v831
        %v833 = vmul.f32 %v825, %v832
        %v835 = vlaneseq
        %v836 = vshrl.u32 %v835, 7
        %v837 = vsub.s32 0, %v836
        %v838 = vrot.slane %v819, %v837
        %v840 = vmul.f32 %v833, %v838
        %v842 = vlaneseq
        %v843 = vshrl.u32 %v842, 7
        %v844 = vsub.s32 0, %v843
        %v845 = vrot.slane %v820, %v844
        %v847 = vadd.f32 %v840, %v845
        %v848 = vld [vmem:[%s9] sm:$0xff]
        %v849 = vld [vmem:[%s9 + $0x8] sm:$0xff]
        %v850 = vld [vmem:[%s9 + $0x10] sm:$0xff]
        %v851 = vld [vmem:[%s9 + $0x18] sm:$0xff]
        %v852 = vld [vmem:[%s10] sm:$0x1]
        %v854 = vlaneseq
        %v855 = vshrl.u32 %v854, 7
        %v856 = vsub.s32 0, %v855
        %v857 = vrot.slane %v852, %v856
        %v860 = vsel %vm439, %v847, 0
        %862 = vmatprep.subr.mxu0 0.0
        %863 = vmatpush1.msra.mxu0 %v848
        %864 = vmatprep.subr.mxu0 0.0
        %865 = vmatpush1.msra.mxu0 %v849
        %866 = vmatprep.subr.mxu0 0.0
        %867 = vmatpush1.msra.mxu0 %v850
        %868 = vmatprep.subr.mxu0 0.0
        %869 = vmatpush1.msra.mxu0 %v851
        %870 = vmatprep.subr.mxu0 0.0
        %871 = vmatpush1.msra.mxu0 0.0
        %872 = vmatprep.subr.mxu0 0.0
        %873 = vmatpush1.msra.mxu0 0.0
        %874 = vmatprep.subr.mxu0 0.0
        %875 = vmatpush1.msra.mxu0 0.0
        %876 = vmatprep.subr.mxu0 0.0
        %877 = vmatpush1.msra.mxu0 0.0
        %878 = vmatprep.subr.mxu0 0.0
        %879 = vmatpush1.msra.mxu0 0.0
        %880 = vmatprep.subr.mxu0 0.0
        %881 = vmatpush1.msra.mxu0 0.0
        %882 = vmatprep.subr.mxu0 0.0
        %883 = vmatpush1.msra.mxu0 0.0
        %884 = vmatprep.subr.mxu0 0.0
        %885 = vmatpush1.msra.mxu0 0.0
        %886 = vmatprep.subr.mxu0 0.0
        %887 = vmatpush1.msra.mxu0 0.0
        %888 = vmatprep.subr.mxu0 0.0
        %889 = vmatpush1.msra.mxu0 0.0
        %890 = vmatprep.subr.mxu0 0.0
        %891 = vmatpush1.msra.mxu0 0.0
        %892 = vmatprep.subr.mxu0 0.0
        %893 = vmatpush1.msra.mxu0 0.0
        %894 = vmatprep.subr.mxu0 0.0
        %895 = vmatpush1.msra.mxu0 0.0
        %896 = vmatprep.subr.mxu0 0.0
        %897 = vmatpush1.msra.mxu0 0.0
        %898 = vmatprep.subr.mxu0 0.0
        %899 = vmatpush1.msra.mxu0 0.0
        %900 = vmatprep.subr.mxu0 0.0
        %901 = vmatpush1.msra.mxu0 0.0
        %902 = vmatprep.subr.mxu0 0.0
        %903 = vmatpush1.msra.mxu0 0.0
        %904 = vmatprep.subr.mxu0 0.0
        %905 = vmatpush1.msra.mxu0 0.0
        %906 = vmatprep.subr.mxu0 0.0
        %907 = vmatpush1.msra.mxu0 0.0
        %908 = vmatprep.subr.mxu0 0.0
        %909 = vmatpush1.msra.mxu0 0.0
        %910 = vmatprep.subr.mxu0 0.0
        %911 = vmatpush1.msra.mxu0 0.0
        %912 = vmatprep.subr.mxu0 0.0
        %913 = vmatpush1.msra.mxu0 0.0
        %914 = vmatprep.subr.mxu0 0.0
        %915 = vmatpush1.msra.mxu0 0.0
        %916 = vmatprep.subr.mxu0 0.0
        %917 = vmatpush1.msra.mxu0 0.0
        %918 = vmatprep.subr.mxu0 0.0
        %919 = vmatpush1.msra.mxu0 0.0
        %920 = vmatprep.subr.mxu0 0.0
        %921 = vmatpush1.msra.mxu0 0.0
        %922 = vmatprep.subr.mxu0 0.0
        %923 = vmatpush1.msra.mxu0 0.0
        %924 = vmatprep.subr.mxu0 0.0
        %925 = vmatpush1.msra.mxu0 0.0
        %926 = vmatprep.mubr.f32.mxu0 0.0
        %927 = vmatmul.mubr.f32.gmra.mrb[0].mxu0 %v860
        %v928 = vpop.f32.mrb[0].mxu0
        %v929 = vadd.f32 %v857, %v928
        %v930 = vpop.f32.mrb[0].mxu0
        %931 = vdwg.mxu0
        %v932 = vmul.f32 %v929, 0.5
        %v933 = vmul.f32 %v929, 0.044715
        %v934 = vmul.f32 %v933, %v929
        %v935 = vmul.f32 %v934, %v929
        %v936 = vadd.f32 %v929, %v935
        %v937 = vmul.f32 %v936, 0.7978846
        %v938 = vtanh.pop %v937
        %v939 = vadd.f32 %v938, 1.0
        %v940 = vmul.f32 %v932, %v939
        %v941 = vld [vmem:[%s11] sm:$0xff]
        %v942 = vld [vmem:[%s11 + $0x8] sm:$0xff]
        %v943 = vld [vmem:[%s11 + $0x10] sm:$0xff]
        %v944 = vld [vmem:[%s11 + $0x18] sm:$0xff]
        %v945 = vld [vmem:[%s11 + $0x20] sm:$0xff]
        %v946 = vld [vmem:[%s11 + $0x28] sm:$0xff]
        %v947 = vld [vmem:[%s11 + $0x30] sm:$0xff]
        %v948 = vld [vmem:[%s11 + $0x38] sm:$0xff]
        %v949 = vld [vmem:[%s11 + $0x40] sm:$0xff]
        %v950 = vld [vmem:[%s11 + $0x48] sm:$0xff]
        %v951 = vld [vmem:[%s11 + $0x50] sm:$0xff]
        %v952 = vld [vmem:[%s11 + $0x58] sm:$0xff]
        %v953 = vld [vmem:[%s11 + $0x60] sm:$0xff]
        %v954 = vld [vmem:[%s11 + $0x68] sm:$0xff]
        %v955 = vld [vmem:[%s11 + $0x70] sm:$0xff]
        %v956 = vld [vmem:[%s11 + $0x78] sm:$0xff]
        %957 = vmatprep.subr.mxu0 0.0
        %958 = vmatpush1.msra.mxu0 %v941
        %959 = vmatprep.subr.mxu0 0.0
        %960 = vmatpush1.msra.mxu0 %v942
        %961 = vmatprep.subr.mxu0 0.0
        %962 = vmatpush1.msra.mxu0 %v943
        %963 = vmatprep.subr.mxu0 0.0
        %964 = vmatpush1.msra.mxu0 %v944
        %965 = vmatprep.subr.mxu0 0.0
        %966 = vmatpush1.msra.mxu0 %v945
        %967 = vmatprep.subr.mxu0 0.0
        %968 = vmatpush1.msra.mxu0 %v946
        %969 = vmatprep.subr.mxu0 0.0
        %970 = vmatpush1.msra.mxu0 %v947
        %971 = vmatprep.subr.mxu0 0.0
        %972 = vmatpush1.msra.mxu0 %v948
        %973 = vmatprep.subr.mxu0 0.0
        %974 = vmatpush1.msra.mxu0 %v949
        %975 = vmatprep.subr.mxu0 0.0
        %976 = vmatpush1.msra.mxu0 %v950
        %977 = vmatprep.subr.mxu0 0.0
        %978 = vmatpush1.msra.mxu0 %v951
        %979 = vmatprep.subr.mxu0 0.0
        %980 = vmatpush1.msra.mxu0 %v952
        %981 = vmatprep.subr.mxu0 0.0
        %982 = vmatpush1.msra.mxu0 %v953
        %983 = vmatprep.subr.mxu0 0.0
        %984 = vmatpush1.msra.mxu0 %v954
        %985 = vmatprep.subr.mxu0 0.0
        %986 = vmatpush1.msra.mxu0 %v955
        %987 = vmatprep.subr.mxu0 0.0
        %988 = vmatpush1.msra.mxu0 %v956
        %989 = vmatprep.subr.mxu0 0.0
        %990 = vmatpush1.msra.mxu0 0.0
        %991 = vmatprep.subr.mxu0 0.0
        %992 = vmatpush1.msra.mxu0 0.0
        %993 = vmatprep.subr.mxu0 0.0
        %994 = vmatpush1.msra.mxu0 0.0
        %995 = vmatprep.subr.mxu0 0.0
        %996 = vmatpush1.msra.mxu0 0.0
        %997 = vmatprep.subr.mxu0 0.0
        %998 = vmatpush1.msra.mxu0 0.0
        %999 = vmatprep.subr.mxu0 0.0
        %1000 = vmatpush1.msra.mxu0 0.0
        %1001 = vmatprep.subr.mxu0 0.0
        %1002 = vmatpush1.msra.mxu0 0.0
        %1003 = vmatprep.subr.mxu0 0.0
        %1004 = vmatpush1.msra.mxu0 0.0
        %1005 = vmatprep.subr.mxu0 0.0
        %1006 = vmatpush1.msra.mxu0 0.0
        %1007 = vmatprep.subr.mxu0 0.0
        %1008 = vmatpush1.msra.mxu0 0.0
        %1009 = vmatprep.subr.mxu0 0.0
        %1010 = vmatpush1.msra.mxu0 0.0
        %1011 = vmatprep.subr.mxu0 0.0
        %1012 = vmatpush1.msra.mxu0 0.0
        %1013 = vmatprep.subr.mxu0 0.0
        %1014 = vmatpush1.msra.mxu0 0.0
        %1015 = vmatprep.subr.mxu0 0.0
        %1016 = vmatpush1.msra.mxu0 0.0
        %1017 = vmatprep.subr.mxu0 0.0
        %1018 = vmatpush1.msra.mxu0 0.0
        %1019 = vmatprep.subr.mxu0 0.0
        %1020 = vmatpush1.msra.mxu0 0.0
        %1021 = vmatprep.mubr.f32.mxu0 0.0
        %1022 = vmatmul.mubr.f32.gmra.mrb[0].mxu0 %v940
        %v1023 = vpop.f32.mrb[0].mxu0
        %v1024 = vadd.f32 0.0, %v1023
        %v1025 = vpop.f32.mrb[0].mxu0
        %1026 = vdwg.mxu0
        %v1027 = vadd.f32 %v818, %v1024
        %v1028 = vld [vmem:[%s12] sm:$0x1]
        %v1030 = vlaneseq
        %v1031 = vshrl.u32 %v1030, 7
        %v1032 = vsub.s32 0, %v1031
        %v1033 = vrot.slane %v1028, %v1032
        %v1035 = vadd.f32 %v1027, %v1033
        %1036 = vst.msk [vmem:[%s431] sm:$0xff] %vm439, %v1035
        %s1037 = sand.u32 %s313, 1
        %s1038 = scalar_lea.sflag [#allocation3], %s1037
        %s1039 = sand.u32 %s313, 1
        %s1040 = smul.addr %s1039, 8
        %s1041 = scalar_lea.vmem [#allocation2], %s1040
        // Predicated region
        $region80: #{tpu_custom_call.1} parent=71 // pred_check
          %p1042 = pneg %p323
        $region81: #{tpu_custom_call.1} parent=71 // pred_check_branch
          %1044 = sbr.rel (%p1042) target = $region83
        $region82: #{tpu_custom_call.1} parent=71 // pred_region
          %s1046 = ssub.s32 128, 128
          %1047 = vsyncadd %s1038, %s1046
          %s1048 = smul.addr %s27, 128
          %s1049 = scalar_lea.hbm %s13, %s1048
          %s1051 = sshll.u32 %s1041, 4
          %s1052 = int_to_ptr.vmem [resolvable:$true] %s1051
          %1054 = dma.vmem_to_hbm [thread:$0]  %s1052, 128, %s1049, %s1038
        $region83: #{tpu_custom_call.1} parent=71 // pred_fallthru
          _
      $region72: #{tpu_custom_call.1} parent=5 // pred_fallthru
        _
      %p1055 = scmp.le.s32.totalorder 2, %s22
      // Predicated region
      $region84: #{tpu_custom_call.1} parent=5 // pred_check
        %p1056 = pneg %p1055
      $region85: #{tpu_custom_call.1} parent=5 // pred_check_branch
        %1058 = sbr.rel (%p1056) target = $region87
      $region86: #{tpu_custom_call.1} parent=5 // pred_region
        %s1059 = ssub.s32 %s22, 2
        // Predicated region
        $region88: #{tpu_custom_call.1} parent=86 // pred_check
          %p1060 = pneg %p329
        $region89: #{tpu_custom_call.1} parent=86 // pred_check_branch
          %1062 = sbr.rel (%p1060) target = $region91
        $region90: #{tpu_custom_call.1} parent=86 // pred_region
          %s1063 = sand.u32 %s314, 1
          %s1064 = scalar_lea.sflag [#allocation3], %s1063
          %s1065 = sand.u32 %s314, 1
          %s1066 = smul.addr %s1065, 8
          %s1067 = scalar_lea.vmem [#allocation2], %s1066
          %1068 = dma.done %s1064, 128
        $region91: #{tpu_custom_call.1} parent=86 // pred_fallthru
          _
      $region87: #{tpu_custom_call.1} parent=5 // pred_fallthru
        _
    $region6: #{tpu_custom_call.1} parent=1 // loop_footer
      %s26 = sadd.s32 1, %s22
    $region7: #{tpu_custom_call.1} parent=1 // loop_footer_branch
      %21 = sbr.rel target = $region3
    $region8: #{tpu_custom_call.1} parent=1 // loop_exit
      _
    %1069 = vsyncpa [#allocation3], 1
    %s1070 = scalar_lea.sflag [#allocation3], 1
    %1071 = vsyncpa %s1070, 1

</llo_original>
